<compile_context>
chip_gen: v7x
topology: tpu7x:2x2x1
jax: 0.10.0
libtpu: 0.0.40
codegen_flags: <defaults>
</compile_context>

<pallas_src>
import math

import jax
import jax.numpy as jnp
from jax import lax
from jax.experimental import pallas as pl
from jax.experimental.pallas import tpu as pltpu


def _layernorm_f32(y, gamma, beta, eps=1e-5):
    # Single reduction pass: E[y] and E[y^2] computed together,
    # var = E[y^2] - E[y]^2 (halves the XLU cross-lane reductions).
    mu = jnp.mean(y, axis=-1, keepdims=True)
    mu2 = jnp.mean(y * y, axis=-1, keepdims=True)
    var = mu2 - mu * mu
    return (y - mu) * lax.rsqrt(var + eps) * gamma + beta


def transformer_block_kernel(x_ref, wqkv_ref, wu_ref, bu_ref, g1_ref, b1_ref,
                             wf1_ref, bf1_ref, wf2_ref, bf2_ref, g2_ref,
                             b2_ref, o_ref):
    t, e = x_ref.shape
    heads = wu_ref.shape[0]
    he = heads * e
    cdt = wqkv_ref.dtype                  # MXU compute dtype (bf16 from wrapper)
    inv_sqrt_e = 1.0 / math.sqrt(e)

    x = x_ref[...]                        # (t, e), input dtype
    x_c = x.astype(cdt)

    # --- fused, lane-dense QKV projection (N = 3*h*e, multiple of 128) ------
    qkv = jnp.dot(x_c, wqkv_ref[...],
                  preferred_element_type=jnp.float32)        # (t, 3*h*e) f32

    # --- per-head attention with fused unify-heads accumulation -------------
    attended = jnp.zeros((t, e), jnp.float32)
    for hh in range(heads):               # static unroll (small head count)
        q_h = qkv[:, hh * e:(hh + 1) * e].astype(cdt)
        k_h = qkv[:, he + hh * e: he + (hh + 1) * e].astype(cdt)
        v_h = qkv[:, 2 * he + hh * e: 2 * he + (hh + 1) * e].astype(cdt)

        # q @ k^T expressed with explicit contracting dims -> no XLU transpose.
        s = lax.dot_general(q_h, k_h,
                            dimension_numbers=(((1,), (1,)), ((), ())),
                            preferred_element_type=jnp.float32) * inv_sqrt_e
        s = s - jnp.max(s, axis=-1, keepdims=True)            # f32 stats
        p = jnp.exp(s)
        p = p * pl.reciprocal(jnp.sum(p, axis=-1, keepdims=True), approx=True)

        o_h = jnp.dot(p.astype(cdt), v_h,
                      preferred_element_type=jnp.float32)      # (t, e) f32
        # Fused unify-heads projection: accumulate directly into (t, e).
        attended = attended + jnp.dot(o_h.astype(cdt), wu_ref[hh],
                                      preferred_element_type=jnp.float32)
    attended = attended + bu_ref[...]     # (1, e) f32 broadcast

    # --- residual + norm1 ----------------------------------------------------
    x1 = _layernorm_f32(attended + x.astype(jnp.float32),
                        g1_ref[...], b1_ref[...])

    # --- feed-forward: Linear -> ReLU -> Linear ------------------------------
    h1 = jnp.dot(x1.astype(cdt), wf1_ref[...],
                 preferred_element_type=jnp.float32) + bf1_ref[...]
    h1 = jnp.maximum(h1, 0.0)
    ffo = jnp.dot(h1.astype(cdt), wf2_ref[...],
                  preferred_element_type=jnp.float32) + bf2_ref[...]

    # --- residual + norm2 ----------------------------------------------------
    x2 = _layernorm_f32(ffo + x1, g2_ref[...], b2_ref[...])

    # dropout(p=0.0) is identity.
    o_ref[...] = x2.astype(o_ref.dtype)


def _vmem_limit_bytes():
    """Generation-aware VMEM scoped limit (~3/4 of capacity, <=100 MiB)."""
    try:
        cap = int(pltpu.get_tpu_info().vmem_capacity_bytes)
    except Exception:
        cap = 64 * 1024 * 1024            # conservative fallback (v7x-sized)
    return int(min(cap * 3 // 4, 100 * 1024 * 1024))


def transformer_block(x, params, heads, compute_dtype=jnp.bfloat16):
    b, t, e = x.shape
    he = heads * e
    ff = params["wf1"].shape[1]

    # One-time wrapper-side weight prep (plain XLA):
    #  * fused QKV weight, columns ordered [Q_all_heads | K_all_heads | V_all_heads]
    #  * per-head stacked unify weight (h, e, e) -> cheap leading-dim indexing
    #  * all matmul weights cast to bf16 (MXU feeds); biases / LN params stay f32.
    wqkv = jnp.concatenate([params["wq"], params["wk"], params["wv"]],
                           axis=1).astype(compute_dtype)        # (e, 3*h*e)
    wu = params["wu"].reshape(heads, e, e).astype(compute_dtype)  # (h, e, e)
    wf1 = params["wf1"].astype(compute_dtype)                     # (e, ff)
    wf2 = params["wf2"].astype(compute_dtype)                     # (ff, e)

    grid_spec = pltpu.PrefetchScalarGridSpec(
        num_scalar_prefetch=0,
        grid=(b,),
        in_specs=[
            pl.BlockSpec((None, t, e), lambda bi: (bi, 0, 0)),   # x (batch-squeezed)
            pl.BlockSpec((e, 3 * he), lambda bi: (0, 0)),        # wqkv
            pl.BlockSpec((heads, e, e), lambda bi: (0, 0, 0)),   # wu
            pl.BlockSpec((1, e), lambda bi: (0, 0)),             # bu
            pl.BlockSpec((1, e), lambda bi: (0, 0)),             # g1
            pl.BlockSpec((1, e), lambda bi: (0, 0)),             # b1
            pl.BlockSpec((e, ff), lambda bi: (0, 0)),            # wf1
            pl.BlockSpec((1, ff), lambda bi: (0, 0)),            # bf1
            pl.BlockSpec((ff, e), lambda bi: (0, 0)),            # wf2
            pl.BlockSpec((1, e), lambda bi: (0, 0)),             # bf2
            pl.BlockSpec((1, e), lambda bi: (0, 0)),             # g2
            pl.BlockSpec((1, e), lambda bi: (0, 0)),             # b2
        ],
        out_specs=pl.BlockSpec((None, t, e), lambda bi: (bi, 0, 0)),
    )

    return pl.pallas_call(
        transformer_block_kernel,
        out_shape=jax.ShapeDtypeStruct((b, t, e), x.dtype),
        grid_spec=grid_spec,
        compiler_params=pltpu.CompilerParams(
            dimension_semantics=("parallel",),
            vmem_limit_bytes=_vmem_limit_bytes()),
    )(x, wqkv, wu, params["bu"], params["g1"], params["b1"],
      wf1, params["bf1"], wf2, params["bf2"], params["g2"], params["b2"])


def transformer_block_ref(x, params, heads):
    """Pure-JAX f32 reference mirroring the PyTorch forward."""
    b, t, e = x.shape
    q = (x @ params["wq"]).reshape(b, t, heads, e)
    k = (x @ params["wk"]).reshape(b, t, heads, e)
    v = (x @ params["wv"]).reshape(b, t, heads, e)
    q = jnp.transpose(q, (0, 2, 1, 3)) / math.sqrt(e)      # (b, h, t, e)
    k = jnp.transpose(k, (0, 2, 1, 3))
    v = jnp.transpose(v, (0, 2, 1, 3))
    dot = jnp.einsum("bhte,bhse->bhts", q, k)
    dot = jax.nn.softmax(dot, axis=-1)
    out = jnp.einsum("bhts,bhse->bhte", dot, v)
    out = jnp.transpose(out, (0, 2, 1, 3)).reshape(b, t, heads * e)
    attended = out @ params["wu"] + params["bu"][0]

    def ln(y, g, bta):
        mu = jnp.mean(y, axis=-1, keepdims=True)
        var = jnp.mean((y - mu) ** 2, axis=-1, keepdims=True)
        return (y - mu) / jnp.sqrt(var + 1e-5) * g[0] + bta[0]

    x1 = ln(attended + x, params["g1"], params["b1"])
    h1 = jnp.maximum(x1 @ params["wf1"] + params["bf1"][0], 0.0)
    ffo = h1 @ params["wf2"] + params["bf2"][0]
    return ln(ffo + x1, params["g2"], params["b2"])


def init_params(key, emb, heads, ff_hidden_mult=4):
    he = heads * emb
    ff = ff_hidden_mult * emb
    keys = jax.random.split(key, 8)
    scale = 0.1
    params = {
        "wq": scale * jax.random.normal(keys[0], (emb, he), jnp.float32),
        "wk": scale * jax.random.normal(keys[1], (emb, he), jnp.float32),
        "wv": scale * jax.random.normal(keys[2], (emb, he), jnp.float32),
        "wu": scale * jax.random.normal(keys[3], (he, emb), jnp.float32),
        "bu": scale * jax.random.normal(keys[4], (1, emb), jnp.float32),
        "g1": jnp.ones((1, emb), jnp.float32),
        "b1": jnp.zeros((1, emb), jnp.float32),
        "wf1": scale * jax.random.normal(keys[5], (emb, ff), jnp.float32),
        "bf1": scale * jax.random.normal(keys[6], (1, ff), jnp.float32),
        "wf2": scale * jax.random.normal(keys[7], (ff, emb), jnp.float32),
        "bf2": jnp.zeros((1, emb), jnp.float32),
        "g2": jnp.ones((1, emb), jnp.float32),
        "b2": jnp.zeros((1, emb), jnp.float32),
    }
    return params


if __name__ == "__main__":
    # Small, module-consistent shapes: batch=2, seq=8, emb=32, heads=4.
    B, T, E, H = 2, 8, 32, 4
    key = jax.random.PRNGKey(0)
    kx, kp = jax.random.split(key)
    x = jax.random.normal(kx, (B, T, E), jnp.float32)
    params = init_params(kp, E, H)

    out = transformer_block(x, params, heads=H)
    out = jax.block_until_ready(out)

    ref = transformer_block_ref(x, params, heads=H)
    assert out.shape == (B, T, E)
    # Tolerance accounts for bf16 MXU operands (f32 accumulation) and the
    # approximate EUP reciprocal in the softmax denominator; the f32 reference
    # mirrors the exact PyTorch math.
    assert jnp.allclose(out, ref, atol=7e-2, rtol=7e-2), "mismatch vs reference"

    print("KERNEL_OK")
</pallas_src>

<mosaic_0001>
module attributes {stable_mosaic.version = 11 : i64} {
  func.func @transformer_block_kernel(%arg0: i32, %arg1: memref<1x8x32xf32, #tpu.memory_space<vmem>>, %arg2: memref<32x384xbf16, #tpu.memory_space<vmem>>, %arg3: memref<4x32x32xbf16, #tpu.memory_space<vmem>>, %arg4: memref<1x32xf32, #tpu.memory_space<vmem>>, %arg5: memref<1x32xf32, #tpu.memory_space<vmem>>, %arg6: memref<1x32xf32, #tpu.memory_space<vmem>>, %arg7: memref<32x128xbf16, #tpu.memory_space<vmem>>, %arg8: memref<1x128xf32, #tpu.memory_space<vmem>>, %arg9: memref<128x32xbf16, #tpu.memory_space<vmem>>, %arg10: memref<1x32xf32, #tpu.memory_space<vmem>>, %arg11: memref<1x32xf32, #tpu.memory_space<vmem>>, %arg12: memref<1x32xf32, #tpu.memory_space<vmem>>, %arg13: memref<1x8x32xf32, #tpu.memory_space<vmem>>) attributes {dimension_semantics = [#tpu.dimension_semantics<parallel>], iteration_bounds = array<i64: 2>, scalar_prefetch = 0 : i64, scratch_operands = 0 : i64, tpu.core_type = #tpu.core_type<tc>, window_params = [{transform_indices = @transform_0, window_bounds = array<i64: 1, 8, 32>}, {pipeline_mode = #tpu.pipeline_mode<synchronous>, transform_indices = @transform_1, window_bounds = array<i64: 32, 384>}, {pipeline_mode = #tpu.pipeline_mode<synchronous>, transform_indices = @transform_2, window_bounds = array<i64: 4, 32, 32>}, {pipeline_mode = #tpu.pipeline_mode<synchronous>, transform_indices = @transform_3, window_bounds = array<i64: 1, 32>}, {pipeline_mode = #tpu.pipeline_mode<synchronous>, transform_indices = @transform_4, window_bounds = array<i64: 1, 32>}, {pipeline_mode = #tpu.pipeline_mode<synchronous>, transform_indices = @transform_5, window_bounds = array<i64: 1, 32>}, {pipeline_mode = #tpu.pipeline_mode<synchronous>, transform_indices = @transform_6, window_bounds = array<i64: 32, 128>}, {pipeline_mode = #tpu.pipeline_mode<synchronous>, transform_indices = @transform_7, window_bounds = array<i64: 1, 128>}, {pipeline_mode = #tpu.pipeline_mode<synchronous>, transform_indices = @transform_8, window_bounds = array<i64: 128, 32>}, {pipeline_mode = #tpu.pipeline_mode<synchronous>, transform_indices = @transform_9, window_bounds = array<i64: 1, 32>}, {pipeline_mode = #tpu.pipeline_mode<synchronous>, transform_indices = @transform_10, window_bounds = array<i64: 1, 32>}, {pipeline_mode = #tpu.pipeline_mode<synchronous>, transform_indices = @transform_11, window_bounds = array<i64: 1, 32>}, {transform_indices = @transform_12, window_bounds = array<i64: 1, 8, 32>}]} {
    %c0 = arith.constant 0 : index
    %c0_0 = arith.constant 0 : index
    %c0_1 = arith.constant 0 : index
    %0 = vector.load %arg1[%c0, %c0_0, %c0_1] : memref<1x8x32xf32, #tpu.memory_space<vmem>>, vector<1x8x32xf32>
    %1 = vector.shape_cast %0 : vector<1x8x32xf32> to vector<8x32xf32>
    %2 = arith.truncf %1 : vector<8x32xf32> to vector<8x32xbf16>
    %c0_2 = arith.constant 0 : index
    %c0_3 = arith.constant 0 : index
    %3 = vector.load %arg2[%c0_2, %c0_3] : memref<32x384xbf16, #tpu.memory_space<vmem>>, vector<32x384xbf16>
    %cst = arith.constant dense<0.000000e+00> : vector<8x384xf32>
    %4 = tpu.matmul %2, %3, %cst {dimension_numbers = #tpu.dot_dimension_numbers<[1], [0], [0], [1], [0, 0, 1, 1], [], []>} : vector<8x32xbf16>, vector<32x384xbf16>, vector<8x384xf32> -> vector<8x384xf32>
    %cst_4 = arith.constant 0.000000e+00 : f32
    %5 = vector.broadcast %cst_4 : f32 to vector<8x32xf32>
    %6 = vector.extract_strided_slice %4 {offsets = [0, 0], sizes = [8, 32], strides = [1, 1]} : vector<8x384xf32> to vector<8x32xf32>
    %7 = arith.truncf %6 : vector<8x32xf32> to vector<8x32xbf16>
    %8 = vector.extract_strided_slice %4 {offsets = [0, 128], sizes = [8, 32], strides = [1, 1]} : vector<8x384xf32> to vector<8x32xf32>
    %9 = arith.truncf %8 : vector<8x32xf32> to vector<8x32xbf16>
    %10 = vector.extract_strided_slice %4 {offsets = [0, 256], sizes = [8, 32], strides = [1, 1]} : vector<8x384xf32> to vector<8x32xf32>
    %11 = arith.truncf %10 : vector<8x32xf32> to vector<8x32xbf16>
    %cst_5 = arith.constant dense<0.000000e+00> : vector<8x8xf32>
    %12 = tpu.matmul %7, %9, %cst_5 {dimension_numbers = #tpu.dot_dimension_numbers<[1], [1], [0], [0], [0, 0, 1, 0], [], []>} : vector<8x32xbf16>, vector<8x32xbf16>, vector<8x8xf32> -> vector<8x8xf32>
    %cst_6 = arith.constant 0.176776692 : f32
    %13 = vector.broadcast %cst_6 : f32 to vector<8x8xf32>
    %14 = arith.mulf %12, %13 : vector<8x8xf32>
    %cst_7 = arith.constant dense<0xFF800000> : vector<8xf32>
    %15 = vector.multi_reduction <maximumf>, %14, %cst_7 [1] : vector<8x8xf32> to vector<8xf32>
    %16 = vector.shape_cast %15 : vector<8xf32> to vector<8x1xf32>
    %17 = vector.broadcast %16 : vector<8x1xf32> to vector<8x8xf32>
    %18 = arith.subf %14, %17 : vector<8x8xf32>
    %19 = math.exp %18 : vector<8x8xf32>
    %cst_8 = arith.constant dense<0.000000e+00> : vector<8xf32>
    %20 = vector.multi_reduction <add>, %19, %cst_8 [1] : vector<8x8xf32> to vector<8xf32>
    %21 = vector.shape_cast %20 : vector<8xf32> to vector<8x1xf32>
    %22 = tpu.reciprocal %21 {approx = true} : vector<8x1xf32> -> vector<8x1xf32>
    %23 = vector.broadcast %22 : vector<8x1xf32> to vector<8x8xf32>
    %24 = arith.mulf %19, %23 : vector<8x8xf32>
    %25 = arith.truncf %24 : vector<8x8xf32> to vector<8x8xbf16>
    %cst_9 = arith.constant dense<0.000000e+00> : vector<8x32xf32>
    %26 = tpu.matmul %25, %11, %cst_9 {dimension_numbers = #tpu.dot_dimension_numbers<[1], [0], [0], [1], [0, 0, 1, 1], [], []>} : vector<8x8xbf16>, vector<8x32xbf16>, vector<8x32xf32> -> vector<8x32xf32>
    %27 = arith.truncf %26 : vector<8x32xf32> to vector<8x32xbf16>
    %c0_10 = arith.constant 0 : index
    %c0_11 = arith.constant 0 : index
    %c0_12 = arith.constant 0 : index
    %28 = vector.load %arg3[%c0_10, %c0_11, %c0_12] : memref<4x32x32xbf16, #tpu.memory_space<vmem>>, vector<1x32x32xbf16>
    %29 = vector.shape_cast %28 : vector<1x32x32xbf16> to vector<32x32xbf16>
    %cst_13 = arith.constant dense<0.000000e+00> : vector<8x32xf32>
    %30 = tpu.matmul %27, %29, %cst_13 {dimension_numbers = #tpu.dot_dimension_numbers<[1], [0], [0], [1], [0, 0, 1, 1], [], []>} : vector<8x32xbf16>, vector<32x32xbf16>, vector<8x32xf32> -> vector<8x32xf32>
    %31 = arith.addf %5, %30 : vector<8x32xf32>
    %32 = vector.extract_strided_slice %4 {offsets = [0, 32], sizes = [8, 32], strides = [1, 1]} : vector<8x384xf32> to vector<8x32xf32>
    %33 = arith.truncf %32 : vector<8x32xf32> to vector<8x32xbf16>
    %34 = vector.extract_strided_slice %4 {offsets = [0, 160], sizes = [8, 32], strides = [1, 1]} : vector<8x384xf32> to vector<8x32xf32>
    %35 = arith.truncf %34 : vector<8x32xf32> to vector<8x32xbf16>
    %36 = vector.extract_strided_slice %4 {offsets = [0, 288], sizes = [8, 32], strides = [1, 1]} : vector<8x384xf32> to vector<8x32xf32>
    %37 = arith.truncf %36 : vector<8x32xf32> to vector<8x32xbf16>
    %cst_14 = arith.constant dense<0.000000e+00> : vector<8x8xf32>
    %38 = tpu.matmul %33, %35, %cst_14 {dimension_numbers = #tpu.dot_dimension_numbers<[1], [1], [0], [0], [0, 0, 1, 0], [], []>} : vector<8x32xbf16>, vector<8x32xbf16>, vector<8x8xf32> -> vector<8x8xf32>
    %cst_15 = arith.constant 0.176776692 : f32
    %39 = vector.broadcast %cst_15 : f32 to vector<8x8xf32>
    %40 = arith.mulf %38, %39 : vector<8x8xf32>
    %cst_16 = arith.constant dense<0xFF800000> : vector<8xf32>
    %41 = vector.multi_reduction <maximumf>, %40, %cst_16 [1] : vector<8x8xf32> to vector<8xf32>
    %42 = vector.shape_cast %41 : vector<8xf32> to vector<8x1xf32>
    %43 = vector.broadcast %42 : vector<8x1xf32> to vector<8x8xf32>
    %44 = arith.subf %40, %43 : vector<8x8xf32>
    %45 = math.exp %44 : vector<8x8xf32>
    %cst_17 = arith.constant dense<0.000000e+00> : vector<8xf32>
    %46 = vector.multi_reduction <add>, %45, %cst_17 [1] : vector<8x8xf32> to vector<8xf32>
    %47 = vector.shape_cast %46 : vector<8xf32> to vector<8x1xf32>
    %48 = tpu.reciprocal %47 {approx = true} : vector<8x1xf32> -> vector<8x1xf32>
    %49 = vector.broadcast %48 : vector<8x1xf32> to vector<8x8xf32>
    %50 = arith.mulf %45, %49 : vector<8x8xf32>
    %51 = arith.truncf %50 : vector<8x8xf32> to vector<8x8xbf16>
    %cst_18 = arith.constant dense<0.000000e+00> : vector<8x32xf32>
    %52 = tpu.matmul %51, %37, %cst_18 {dimension_numbers = #tpu.dot_dimension_numbers<[1], [0], [0], [1], [0, 0, 1, 1], [], []>} : vector<8x8xbf16>, vector<8x32xbf16>, vector<8x32xf32> -> vector<8x32xf32>
    %53 = arith.truncf %52 : vector<8x32xf32> to vector<8x32xbf16>
    %c1 = arith.constant 1 : index
    %c0_19 = arith.constant 0 : index
    %c0_20 = arith.constant 0 : index
    %54 = vector.load %arg3[%c1, %c0_19, %c0_20] : memref<4x32x32xbf16, #tpu.memory_space<vmem>>, vector<1x32x32xbf16>
    %55 = vector.shape_cast %54 : vector<1x32x32xbf16> to vector<32x32xbf16>
    %cst_21 = arith.constant dense<0.000000e+00> : vector<8x32xf32>
    %56 = tpu.matmul %53, %55, %cst_21 {dimension_numbers = #tpu.dot_dimension_numbers<[1], [0], [0], [1], [0, 0, 1, 1], [], []>} : vector<8x32xbf16>, vector<32x32xbf16>, vector<8x32xf32> -> vector<8x32xf32>
    %57 = arith.addf %31, %56 : vector<8x32xf32>
    %58 = vector.extract_strided_slice %4 {offsets = [0, 64], sizes = [8, 32], strides = [1, 1]} : vector<8x384xf32> to vector<8x32xf32>
    %59 = arith.truncf %58 : vector<8x32xf32> to vector<8x32xbf16>
    %60 = vector.extract_strided_slice %4 {offsets = [0, 192], sizes = [8, 32], strides = [1, 1]} : vector<8x384xf32> to vector<8x32xf32>
    %61 = arith.truncf %60 : vector<8x32xf32> to vector<8x32xbf16>
    %62 = vector.extract_strided_slice %4 {offsets = [0, 320], sizes = [8, 32], strides = [1, 1]} : vector<8x384xf32> to vector<8x32xf32>
    %63 = arith.truncf %62 : vector<8x32xf32> to vector<8x32xbf16>
    %cst_22 = arith.constant dense<0.000000e+00> : vector<8x8xf32>
    %64 = tpu.matmul %59, %61, %cst_22 {dimension_numbers = #tpu.dot_dimension_numbers<[1], [1], [0], [0], [0, 0, 1, 0], [], []>} : vector<8x32xbf16>, vector<8x32xbf16>, vector<8x8xf32> -> vector<8x8xf32>
    %cst_23 = arith.constant 0.176776692 : f32
    %65 = vector.broadcast %cst_23 : f32 to vector<8x8xf32>
    %66 = arith.mulf %64, %65 : vector<8x8xf32>
    %cst_24 = arith.constant dense<0xFF800000> : vector<8xf32>
    %67 = vector.multi_reduction <maximumf>, %66, %cst_24 [1] : vector<8x8xf32> to vector<8xf32>
    %68 = vector.shape_cast %67 : vector<8xf32> to vector<8x1xf32>
    %69 = vector.broadcast %68 : vector<8x1xf32> to vector<8x8xf32>
    %70 = arith.subf %66, %69 : vector<8x8xf32>
    %71 = math.exp %70 : vector<8x8xf32>
    %cst_25 = arith.constant dense<0.000000e+00> : vector<8xf32>
    %72 = vector.multi_reduction <add>, %71, %cst_25 [1] : vector<8x8xf32> to vector<8xf32>
    %73 = vector.shape_cast %72 : vector<8xf32> to vector<8x1xf32>
    %74 = tpu.reciprocal %73 {approx = true} : vector<8x1xf32> -> vector<8x1xf32>
    %75 = vector.broadcast %74 : vector<8x1xf32> to vector<8x8xf32>
    %76 = arith.mulf %71, %75 : vector<8x8xf32>
    %77 = arith.truncf %76 : vector<8x8xf32> to vector<8x8xbf16>
    %cst_26 = arith.constant dense<0.000000e+00> : vector<8x32xf32>
    %78 = tpu.matmul %77, %63, %cst_26 {dimension_numbers = #tpu.dot_dimension_numbers<[1], [0], [0], [1], [0, 0, 1, 1], [], []>} : vector<8x8xbf16>, vector<8x32xbf16>, vector<8x32xf32> -> vector<8x32xf32>
    %79 = arith.truncf %78 : vector<8x32xf32> to vector<8x32xbf16>
    %c2 = arith.constant 2 : index
    %c0_27 = arith.constant 0 : index
    %c0_28 = arith.constant 0 : index
    %80 = vector.load %arg3[%c2, %c0_27, %c0_28] : memref<4x32x32xbf16, #tpu.memory_space<vmem>>, vector<1x32x32xbf16>
    %81 = vector.shape_cast %80 : vector<1x32x32xbf16> to vector<32x32xbf16>
    %cst_29 = arith.constant dense<0.000000e+00> : vector<8x32xf32>
    %82 = tpu.matmul %79, %81, %cst_29 {dimension_numbers = #tpu.dot_dimension_numbers<[1], [0], [0], [1], [0, 0, 1, 1], [], []>} : vector<8x32xbf16>, vector<32x32xbf16>, vector<8x32xf32> -> vector<8x32xf32>
    %83 = arith.addf %57, %82 : vector<8x32xf32>
    %84 = vector.extract_strided_slice %4 {offsets = [0, 96], sizes = [8, 32], strides = [1, 1]} : vector<8x384xf32> to vector<8x32xf32>
    %85 = arith.truncf %84 : vector<8x32xf32> to vector<8x32xbf16>
    %86 = vector.extract_strided_slice %4 {offsets = [0, 224], sizes = [8, 32], strides = [1, 1]} : vector<8x384xf32> to vector<8x32xf32>
    %87 = arith.truncf %86 : vector<8x32xf32> to vector<8x32xbf16>
    %88 = vector.extract_strided_slice %4 {offsets = [0, 352], sizes = [8, 32], strides = [1, 1]} : vector<8x384xf32> to vector<8x32xf32>
    %89 = arith.truncf %88 : vector<8x32xf32> to vector<8x32xbf16>
    %cst_30 = arith.constant dense<0.000000e+00> : vector<8x8xf32>
    %90 = tpu.matmul %85, %87, %cst_30 {dimension_numbers = #tpu.dot_dimension_numbers<[1], [1], [0], [0], [0, 0, 1, 0], [], []>} : vector<8x32xbf16>, vector<8x32xbf16>, vector<8x8xf32> -> vector<8x8xf32>
    %cst_31 = arith.constant 0.176776692 : f32
    %91 = vector.broadcast %cst_31 : f32 to vector<8x8xf32>
    %92 = arith.mulf %90, %91 : vector<8x8xf32>
    %cst_32 = arith.constant dense<0xFF800000> : vector<8xf32>
    %93 = vector.multi_reduction <maximumf>, %92, %cst_32 [1] : vector<8x8xf32> to vector<8xf32>
    %94 = vector.shape_cast %93 : vector<8xf32> to vector<8x1xf32>
    %95 = vector.broadcast %94 : vector<8x1xf32> to vector<8x8xf32>
    %96 = arith.subf %92, %95 : vector<8x8xf32>
    %97 = math.exp %96 : vector<8x8xf32>
    %cst_33 = arith.constant dense<0.000000e+00> : vector<8xf32>
    %98 = vector.multi_reduction <add>, %97, %cst_33 [1] : vector<8x8xf32> to vector<8xf32>
    %99 = vector.shape_cast %98 : vector<8xf32> to vector<8x1xf32>
    %100 = tpu.reciprocal %99 {approx = true} : vector<8x1xf32> -> vector<8x1xf32>
    %101 = vector.broadcast %100 : vector<8x1xf32> to vector<8x8xf32>
    %102 = arith.mulf %97, %101 : vector<8x8xf32>
    %103 = arith.truncf %102 : vector<8x8xf32> to vector<8x8xbf16>
    %cst_34 = arith.constant dense<0.000000e+00> : vector<8x32xf32>
    %104 = tpu.matmul %103, %89, %cst_34 {dimension_numbers = #tpu.dot_dimension_numbers<[1], [0], [0], [1], [0, 0, 1, 1], [], []>} : vector<8x8xbf16>, vector<8x32xbf16>, vector<8x32xf32> -> vector<8x32xf32>
    %105 = arith.truncf %104 : vector<8x32xf32> to vector<8x32xbf16>
    %c3 = arith.constant 3 : index
    %c0_35 = arith.constant 0 : index
    %c0_36 = arith.constant 0 : index
    %106 = vector.load %arg3[%c3, %c0_35, %c0_36] : memref<4x32x32xbf16, #tpu.memory_space<vmem>>, vector<1x32x32xbf16>
    %107 = vector.shape_cast %106 : vector<1x32x32xbf16> to vector<32x32xbf16>
    %cst_37 = arith.constant dense<0.000000e+00> : vector<8x32xf32>
    %108 = tpu.matmul %105, %107, %cst_37 {dimension_numbers = #tpu.dot_dimension_numbers<[1], [0], [0], [1], [0, 0, 1, 1], [], []>} : vector<8x32xbf16>, vector<32x32xbf16>, vector<8x32xf32> -> vector<8x32xf32>
    %109 = arith.addf %83, %108 : vector<8x32xf32>
    %c0_38 = arith.constant 0 : index
    %c0_39 = arith.constant 0 : index
    %110 = vector.load %arg4[%c0_38, %c0_39] : memref<1x32xf32, #tpu.memory_space<vmem>>, vector<1x32xf32>
    %111 = vector.broadcast %110 : vector<1x32xf32> to vector<8x32xf32>
    %112 = arith.addf %109, %111 : vector<8x32xf32>
    %113 = arith.addf %112, %1 : vector<8x32xf32>
    %c0_40 = arith.constant 0 : index
    %c0_41 = arith.constant 0 : index
    %114 = vector.load %arg5[%c0_40, %c0_41] : memref<1x32xf32, #tpu.memory_space<vmem>>, vector<1x32xf32>
    %c0_42 = arith.constant 0 : index
    %c0_43 = arith.constant 0 : index
    %115 = vector.load %arg6[%c0_42, %c0_43] : memref<1x32xf32, #tpu.memory_space<vmem>>, vector<1x32xf32>
    %cst_44 = arith.constant dense<0.000000e+00> : vector<8xf32>
    %116 = vector.multi_reduction <add>, %113, %cst_44 [1] : vector<8x32xf32> to vector<8xf32>
    %117 = vector.shape_cast %116 : vector<8xf32> to vector<8x1xf32>
    %cst_45 = arith.constant 3.200000e+01 : f32
    %118 = vector.broadcast %cst_45 : f32 to vector<8x1xf32>
    %119 = arith.divf %117, %118 : vector<8x1xf32>
    %120 = arith.mulf %113, %113 : vector<8x32xf32>
    %cst_46 = arith.constant dense<0.000000e+00> : vector<8xf32>
    %121 = vector.multi_reduction <add>, %120, %cst_46 [1] : vector<8x32xf32> to vector<8xf32>
    %122 = vector.shape_cast %121 : vector<8xf32> to vector<8x1xf32>
    %cst_47 = arith.constant 3.200000e+01 : f32
    %123 = vector.broadcast %cst_47 : f32 to vector<8x1xf32>
    %124 = arith.divf %122, %123 : vector<8x1xf32>
    %125 = arith.mulf %119, %119 : vector<8x1xf32>
    %126 = arith.subf %124, %125 : vector<8x1xf32>
    %127 = vector.broadcast %119 : vector<8x1xf32> to vector<8x32xf32>
    %128 = arith.subf %113, %127 : vector<8x32xf32>
    %cst_48 = arith.constant 9.99999974E-6 : f32
    %129 = vector.broadcast %cst_48 : f32 to vector<8x1xf32>
    %130 = arith.addf %126, %129 : vector<8x1xf32>
    %131 = math.rsqrt %130 : vector<8x1xf32>
    %132 = vector.broadcast %131 : vector<8x1xf32> to vector<8x32xf32>
    %133 = arith.mulf %128, %132 : vector<8x32xf32>
    %134 = vector.broadcast %114 : vector<1x32xf32> to vector<8x32xf32>
    %135 = arith.mulf %133, %134 : vector<8x32xf32>
    %136 = vector.broadcast %115 : vector<1x32xf32> to vector<8x32xf32>
    %137 = arith.addf %135, %136 : vector<8x32xf32>
    %138 = arith.truncf %137 : vector<8x32xf32> to vector<8x32xbf16>
    %c0_49 = arith.constant 0 : index
    %c0_50 = arith.constant 0 : index
    %139 = vector.load %arg7[%c0_49, %c0_50] : memref<32x128xbf16, #tpu.memory_space<vmem>>, vector<32x128xbf16>
    %cst_51 = arith.constant dense<0.000000e+00> : vector<8x128xf32>
    %140 = tpu.matmul %138, %139, %cst_51 {dimension_numbers = #tpu.dot_dimension_numbers<[1], [0], [0], [1], [0, 0, 1, 1], [], []>} : vector<8x32xbf16>, vector<32x128xbf16>, vector<8x128xf32> -> vector<8x128xf32>
    %c0_52 = arith.constant 0 : index
    %c0_53 = arith.constant 0 : index
    %141 = vector.load %arg8[%c0_52, %c0_53] : memref<1x128xf32, #tpu.memory_space<vmem>>, vector<1x128xf32>
    %142 = vector.broadcast %141 : vector<1x128xf32> to vector<8x128xf32>
    %143 = arith.addf %140, %142 : vector<8x128xf32>
    %cst_54 = arith.constant 0.000000e+00 : f32
    %144 = vector.broadcast %cst_54 : f32 to vector<8x128xf32>
    %145 = arith.maximumf %143, %144 : vector<8x128xf32>
    %146 = arith.truncf %145 : vector<8x128xf32> to vector<8x128xbf16>
    %c0_55 = arith.constant 0 : index
    %c0_56 = arith.constant 0 : index
    %147 = vector.load %arg9[%c0_55, %c0_56] : memref<128x32xbf16, #tpu.memory_space<vmem>>, vector<128x32xbf16>
    %cst_57 = arith.constant dense<0.000000e+00> : vector<8x32xf32>
    %148 = tpu.matmul %146, %147, %cst_57 {dimension_numbers = #tpu.dot_dimension_numbers<[1], [0], [0], [1], [0, 0, 1, 1], [], []>} : vector<8x128xbf16>, vector<128x32xbf16>, vector<8x32xf32> -> vector<8x32xf32>
    %c0_58 = arith.constant 0 : index
    %c0_59 = arith.constant 0 : index
    %149 = vector.load %arg10[%c0_58, %c0_59] : memref<1x32xf32, #tpu.memory_space<vmem>>, vector<1x32xf32>
    %150 = vector.broadcast %149 : vector<1x32xf32> to vector<8x32xf32>
    %151 = arith.addf %148, %150 : vector<8x32xf32>
    %152 = arith.addf %151, %137 : vector<8x32xf32>
    %c0_60 = arith.constant 0 : index
    %c0_61 = arith.constant 0 : index
    %153 = vector.load %arg11[%c0_60, %c0_61] : memref<1x32xf32, #tpu.memory_space<vmem>>, vector<1x32xf32>
    %c0_62 = arith.constant 0 : index
    %c0_63 = arith.constant 0 : index
    %154 = vector.load %arg12[%c0_62, %c0_63] : memref<1x32xf32, #tpu.memory_space<vmem>>, vector<1x32xf32>
    %cst_64 = arith.constant dense<0.000000e+00> : vector<8xf32>
    %155 = vector.multi_reduction <add>, %152, %cst_64 [1] : vector<8x32xf32> to vector<8xf32>
    %156 = vector.shape_cast %155 : vector<8xf32> to vector<8x1xf32>
    %cst_65 = arith.constant 3.200000e+01 : f32
    %157 = vector.broadcast %cst_65 : f32 to vector<8x1xf32>
    %158 = arith.divf %156, %157 : vector<8x1xf32>
    %159 = arith.mulf %152, %152 : vector<8x32xf32>
    %cst_66 = arith.constant dense<0.000000e+00> : vector<8xf32>
    %160 = vector.multi_reduction <add>, %159, %cst_66 [1] : vector<8x32xf32> to vector<8xf32>
    %161 = vector.shape_cast %160 : vector<8xf32> to vector<8x1xf32>
    %cst_67 = arith.constant 3.200000e+01 : f32
    %162 = vector.broadcast %cst_67 : f32 to vector<8x1xf32>
    %163 = arith.divf %161, %162 : vector<8x1xf32>
    %164 = arith.mulf %158, %158 : vector<8x1xf32>
    %165 = arith.subf %163, %164 : vector<8x1xf32>
    %166 = vector.broadcast %158 : vector<8x1xf32> to vector<8x32xf32>
    %167 = arith.subf %152, %166 : vector<8x32xf32>
    %cst_68 = arith.constant 9.99999974E-6 : f32
    %168 = vector.broadcast %cst_68 : f32 to vector<8x1xf32>
    %169 = arith.addf %165, %168 : vector<8x1xf32>
    %170 = math.rsqrt %169 : vector<8x1xf32>
    %171 = vector.broadcast %170 : vector<8x1xf32> to vector<8x32xf32>
    %172 = arith.mulf %167, %171 : vector<8x32xf32>
    %173 = vector.broadcast %153 : vector<1x32xf32> to vector<8x32xf32>
    %174 = arith.mulf %172, %173 : vector<8x32xf32>
    %175 = vector.broadcast %154 : vector<1x32xf32> to vector<8x32xf32>
    %176 = arith.addf %174, %175 : vector<8x32xf32>
    %c0_69 = arith.constant 0 : index
    %c0_70 = arith.constant 0 : index
    %c0_71 = arith.constant 0 : index
    %177 = vector.load %arg13[%c0_69, %c0_70, %c0_71] : memref<1x8x32xf32, #tpu.memory_space<vmem>>, vector<1x8x32xf32>
    %178 = vector.shape_cast %177 : vector<1x8x32xf32> to vector<8x32xf32>
    %179 = vector.shape_cast %176 : vector<8x32xf32> to vector<1x8x32xf32>
    tpu.vector_store %arg13[%c0_69, %c0_70, %c0_71], %179 {strides = array<i32>} : memref<1x8x32xf32, #tpu.memory_space<vmem>>, vector<1x8x32xf32>,
    return
  }
  func.func @transform_0(%arg0: i32) -> (i32, i32, i32) {
    %c0_i32 = arith.constant 0 : i32
    %c0_i32_0 = arith.constant 0 : i32
    %c0_i32_1 = arith.constant 0 : i32
    return %arg0, %c0_i32, %c0_i32_0 : i32, i32, i32
  }
  func.func @transform_1(%arg0: i32) -> (i32, i32) {
    %c0_i32 = arith.constant 0 : i32
    %c0_i32_0 = arith.constant 0 : i32
    %c0_i32_1 = arith.constant 0 : i32
    return %c0_i32, %c0_i32_0 : i32, i32
  }
  func.func @transform_2(%arg0: i32) -> (i32, i32, i32) {
    %c0_i32 = arith.constant 0 : i32
    %c0_i32_0 = arith.constant 0 : i32
    %c0_i32_1 = arith.constant 0 : i32
    %c0_i32_2 = arith.constant 0 : i32
    return %c0_i32, %c0_i32_0, %c0_i32_1 : i32, i32, i32
  }
  func.func @transform_3(%arg0: i32) -> (i32, i32) {
    %c0_i32 = arith.constant 0 : i32
    %c0_i32_0 = arith.constant 0 : i32
    %c0_i32_1 = arith.constant 0 : i32
    return %c0_i32, %c0_i32_0 : i32, i32
  }
  func.func @transform_4(%arg0: i32) -> (i32, i32) {
    %c0_i32 = arith.constant 0 : i32
    %c0_i32_0 = arith.constant 0 : i32
    %c0_i32_1 = arith.constant 0 : i32
    return %c0_i32, %c0_i32_0 : i32, i32
  }
  func.func @transform_5(%arg0: i32) -> (i32, i32) {
    %c0_i32 = arith.constant 0 : i32
    %c0_i32_0 = arith.constant 0 : i32
    %c0_i32_1 = arith.constant 0 : i32
    return %c0_i32, %c0_i32_0 : i32, i32
  }
  func.func @transform_6(%arg0: i32) -> (i32, i32) {
    %c0_i32 = arith.constant 0 : i32
    %c0_i32_0 = arith.constant 0 : i32
    %c0_i32_1 = arith.constant 0 : i32
    return %c0_i32, %c0_i32_0 : i32, i32
  }
  func.func @transform_7(%arg0: i32) -> (i32, i32) {
    %c0_i32 = arith.constant 0 : i32
    %c0_i32_0 = arith.constant 0 : i32
    %c0_i32_1 = arith.constant 0 : i32
    return %c0_i32, %c0_i32_0 : i32, i32
  }
  func.func @transform_8(%arg0: i32) -> (i32, i32) {
    %c0_i32 = arith.constant 0 : i32
    %c0_i32_0 = arith.constant 0 : i32
    %c0_i32_1 = arith.constant 0 : i32
    return %c0_i32, %c0_i32_0 : i32, i32
  }
  func.func @transform_9(%arg0: i32) -> (i32, i32) {
    %c0_i32 = arith.constant 0 : i32
    %c0_i32_0 = arith.constant 0 : i32
    %c0_i32_1 = arith.constant 0 : i32
    return %c0_i32, %c0_i32_0 : i32, i32
  }
  func.func @transform_10(%arg0: i32) -> (i32, i32) {
    %c0_i32 = arith.constant 0 : i32
    %c0_i32_0 = arith.constant 0 : i32
    %c0_i32_1 = arith.constant 0 : i32
    return %c0_i32, %c0_i32_0 : i32, i32
  }
  func.func @transform_11(%arg0: i32) -> (i32, i32) {
    %c0_i32 = arith.constant 0 : i32
    %c0_i32_0 = arith.constant 0 : i32
    %c0_i32_1 = arith.constant 0 : i32
    return %c0_i32, %c0_i32_0 : i32, i32
  }
  func.func @transform_12(%arg0: i32) -> (i32, i32, i32) {
    %c0_i32 = arith.constant 0 : i32
    %c0_i32_0 = arith.constant 0 : i32
    %c0_i32_1 = arith.constant 0 : i32
    return %arg0, %c0_i32, %c0_i32_0 : i32, i32, i32
  }
}

</mosaic_0001>

<llo_original>
// kernel: tpu_custom_call.1
$region0: #{tpu_custom_call.1}
  #allocation0 [shape = 'u32[]', space=smem, size = 0x4, offset = 0x4, fixed_abs, tag = 'smem constant byte address 0x4 - core index']
  #allocation1 [shape = 'u32[144,128]{1,0:T(1,128)}', space=vmem, size = 0x12000, scoped, tag = 'internal scratch']
  %s0 = inlined_call_operand.vmem [shape: f32[2,8,32], index: 0, kind: input, shape index: {}]
  %s1 = inlined_call_operand.hbm [shape: bf16[32,384], index: 1, kind: input, shape index: {}]
  %s2 = inlined_call_operand.vmem [shape: bf16[4,32,32], index: 2, kind: input, shape index: {}]
  %s3 = inlined_call_operand.vmem [shape: f32[1,32], index: 3, kind: input, shape index: {}]
  %s4 = inlined_call_operand.vmem [shape: f32[1,32], index: 4, kind: input, shape index: {}]
  %s5 = inlined_call_operand.vmem [shape: f32[1,32], index: 5, kind: input, shape index: {}]
  %s6 = inlined_call_operand.hbm [shape: bf16[32,128], index: 6, kind: input, shape index: {}]
  %s7 = inlined_call_operand.vmem [shape: f32[1,128], index: 7, kind: input, shape index: {}]
  %s8 = inlined_call_operand.vmem [shape: bf16[128,32], index: 8, kind: input, shape index: {}]
  %s9 = inlined_call_operand.vmem [shape: f32[1,32], index: 9, kind: input, shape index: {}]
  %s10 = inlined_call_operand.vmem [shape: f32[1,32], index: 10, kind: input, shape index: {}]
  %s11 = inlined_call_operand.vmem [shape: f32[1,32], index: 11, kind: input, shape index: {}]
  %s12 = inlined_call_operand.hbm [shape: f32[2,8,32], index: 12, kind: output, shape index: {}]
  %s13 = sld [smem:[#allocation0]]
  $region89: #{tpu_custom_call.1} parent=0
    _
  %s15 = ssub.s32 1, %s13
  %s16 = scalar_select 0, %s15, %s13
  $region1: #{tpu_custom_call.1} parent=0
    #allocation2 [shape = 'u8[24576]{0}', space=vmem, size = 0x6000, scoped, tag = 'input window, operand 1, single buffered']
    #allocation3 [shape = 's32[2]{0}', space=sflag, size = 0x8, scoped, tag = 'scoped memory for tpu_custom_call.1']
    #allocation4 [shape = 's32[2]{0}', space=sflag, size = 0x8, scoped, tag = 'scoped memory for tpu_custom_call.1']
    #allocation5 [shape = 'u8[8192]{0}', space=vmem, size = 0x2000, scoped, tag = 'input window, operand 6, single buffered']
    #allocation6 [shape = 's32[1]{0}', space=sflag, size = 0x4, scoped, tag = 'scoped memory for tpu_custom_call.1']
    #allocation7 [shape = 'u8[8192]{0}', space=vmem, size = 0x2000, scoped, tag = 'output window, operand 0']
    %17 = vsyncpa [#allocation3], 0
    %18 = vsyncpa [#allocation6], 0
    %19 = vsyncpa [#allocation4], 0
    %s20 = scalar_lea.sflag [#allocation4], 1
    %21 = vsyncpa %s20, 0
    loop: start=0, step=1, limit=4
    $region2: #{tpu_custom_call.1} parent=1 // loop_pre_header
      _
    $region3: #{tpu_custom_call.1} parent=1 // loop_header
      %s23 = sphi 0, %s27
      %p24 = scmp.ge.s32.totalorder %s23, 4
      %s33 = sphi 0, %s35
      %s36 = sphi 0, %s33
      %s37 = sphi 0, %s36
      %s53 = sphi 0, %s37
      %s57 = sphi 0, %s57
      %s59 = sphi 0, %s57
      %s60 = sphi 0, %s59
      %s74 = sphi 0, %s60
      %s78 = sphi 0, %s78
      %s80 = sphi 0, %s78
      %s81 = sphi 0, %s80
      %s95 = sphi 0, %s81
      %s99 = sphi 0, %s99
      %s101 = sphi 0, %s99
      %s102 = sphi 0, %s101
      %s116 = sphi 0, %s102
      %s120 = sphi 0, %s120
      %s122 = sphi 0, %s120
      %s123 = sphi 0, %s122
      %s137 = sphi 0, %s123
      %s141 = sphi 0, %s141
      %s143 = sphi 0, %s141
      %s144 = sphi 0, %s143
      %s158 = sphi 0, %s144
      %s162 = sphi 0, %s162
      %s164 = sphi 0, %s162
      %s165 = sphi 0, %s164
      %s179 = sphi 0, %s165
      %s183 = sphi 0, %s183
      %s185 = sphi 0, %s183
      %s186 = sphi 0, %s185
      %s200 = sphi 0, %s186
      %s204 = sphi 0, %s204
      %s206 = sphi 0, %s204
      %s207 = sphi 0, %s206
      %s221 = sphi 0, %s207
      %s225 = sphi 0, %s225
      %s227 = sphi 0, %s225
      %s228 = sphi 0, %s227
      %s242 = sphi 0, %s228
      %s246 = sphi 0, %s246
      %s248 = sphi 0, %s246
      %s249 = sphi 0, %s248
      %s263 = sphi 0, %s249
      %s267 = sphi 0, %s267
      %s269 = sphi 0, %s267
      %s270 = sphi 0, %s269
      %s284 = sphi 0, %s270
      %s290 = sphi 0, %s292
      %s293 = sphi 0, %s290
      %s294 = sphi 0, %s293
      %s310 = sphi 0, %s294
    $region4: #{tpu_custom_call.1} parent=1 // loop_header_branch
      %26 = sbr.rel (%p24) target = $region8
    $region5: #{tpu_custom_call.1} parent=1 // loop_body
      %s28 = ssub.s32 %s23, 1
      %s29 = ssub.s32 %s23, 2
      %s30 = sadd.s32 %s23, 1
      %s31 = ssub.s32 %s23, %s30
      %p32 = scmp.eq.s32.totalorder %s31, 0
      %s34 = sadd.s32 %s33, 1
      %s35 = scalar_select %p32, %s33, %s34
      %p38 = pneg %p32
      %p39 = scmp.eq.s32.totalorder %s23, 1
      %p40 = por %p38, %p39
      %p41 = scmp.ne.s32.totalorder %s33, %s36
      %p42 = scmp.eq.s32.totalorder %s23, 0
      %p43 = por %p41, %p42
      %p44 = scmp.ne.s32.totalorder %s33, %s36
      %p45 = scmp.eq.s32.totalorder %s28, 1
      %p46 = por %p44, %p45
      %p47 = scmp.ne.s32.totalorder %s36, %s37
      %p48 = scmp.eq.s32.totalorder %s28, 0
      %p49 = por %p47, %p48
      %p50 = scmp.ne.s32.totalorder %s36, %s37
      %p51 = scmp.eq.s32.totalorder %s29, 1
      %p52 = por %p50, %p51
      %p54 = scmp.ne.s32.totalorder %s37, %s53
      %p55 = scmp.eq.s32.totalorder %s29, 0
      %p56 = por %p54, %p55
      %s58 = sadd.s32 %s57, 1
      %p61 = scmp.eq.s32.totalorder %s23, 1
      %p62 = scmp.ne.s32.totalorder %s57, %s59
      %p63 = scmp.eq.s32.totalorder %s23, 0
      %p64 = por %p62, %p63
      %p65 = scmp.ne.s32.totalorder %s57, %s59
      %p66 = scmp.eq.s32.totalorder %s28, 1
      %p67 = por %p65, %p66
      %p68 = scmp.ne.s32.totalorder %s59, %s60
      %p69 = scmp.eq.s32.totalorder %s28, 0
      %p70 = por %p68, %p69
      %p71 = scmp.ne.s32.totalorder %s59, %s60
      %p72 = scmp.eq.s32.totalorder %s29, 1
      %p73 = por %p71, %p72
      %p75 = scmp.ne.s32.totalorder %s60, %s74
      %p76 = scmp.eq.s32.totalorder %s29, 0
      %p77 = por %p75, %p76
      %s79 = sadd.s32 %s78, 1
      %p82 = scmp.eq.s32.totalorder %s23, 1
      %p83 = scmp.ne.s32.totalorder %s78, %s80
      %p84 = scmp.eq.s32.totalorder %s23, 0
      %p85 = por %p83, %p84
      %p86 = scmp.ne.s32.totalorder %s78, %s80
      %p87 = scmp.eq.s32.totalorder %s28, 1
      %p88 = por %p86, %p87
      %p89 = scmp.ne.s32.totalorder %s80, %s81
      %p90 = scmp.eq.s32.totalorder %s28, 0
      %p91 = por %p89, %p90
      %p92 = scmp.ne.s32.totalorder %s80, %s81
      %p93 = scmp.eq.s32.totalorder %s29, 1
      %p94 = por %p92, %p93
      %p96 = scmp.ne.s32.totalorder %s81, %s95
      %p97 = scmp.eq.s32.totalorder %s29, 0
      %p98 = por %p96, %p97
      %s100 = sadd.s32 %s99, 1
      %p103 = scmp.eq.s32.totalorder %s23, 1
      %p104 = scmp.ne.s32.totalorder %s99, %s101
      %p105 = scmp.eq.s32.totalorder %s23, 0
      %p106 = por %p104, %p105
      %p107 = scmp.ne.s32.totalorder %s99, %s101
      %p108 = scmp.eq.s32.totalorder %s28, 1
      %p109 = por %p107, %p108
      %p110 = scmp.ne.s32.totalorder %s101, %s102
      %p111 = scmp.eq.s32.totalorder %s28, 0
      %p112 = por %p110, %p111
      %p113 = scmp.ne.s32.totalorder %s101, %s102
      %p114 = scmp.eq.s32.totalorder %s29, 1
      %p115 = por %p113, %p114
      %p117 = scmp.ne.s32.totalorder %s102, %s116
      %p118 = scmp.eq.s32.totalorder %s29, 0
      %p119 = por %p117, %p118
      %s121 = sadd.s32 %s120, 1
      %p124 = scmp.eq.s32.totalorder %s23, 1
      %p125 = scmp.ne.s32.totalorder %s120, %s122
      %p126 = scmp.eq.s32.totalorder %s23, 0
      %p127 = por %p125, %p126
      %p128 = scmp.ne.s32.totalorder %s120, %s122
      %p129 = scmp.eq.s32.totalorder %s28, 1
      %p130 = por %p128, %p129
      %p131 = scmp.ne.s32.totalorder %s122, %s123
      %p132 = scmp.eq.s32.totalorder %s28, 0
      %p133 = por %p131, %p132
      %p134 = scmp.ne.s32.totalorder %s122, %s123
      %p135 = scmp.eq.s32.totalorder %s29, 1
      %p136 = por %p134, %p135
      %p138 = scmp.ne.s32.totalorder %s123, %s137
      %p139 = scmp.eq.s32.totalorder %s29, 0
      %p140 = por %p138, %p139
      %s142 = sadd.s32 %s141, 1
      %p145 = scmp.eq.s32.totalorder %s23, 1
      %p146 = scmp.ne.s32.totalorder %s141, %s143
      %p147 = scmp.eq.s32.totalorder %s23, 0
      %p148 = por %p146, %p147
      %p149 = scmp.ne.s32.totalorder %s141, %s143
      %p150 = scmp.eq.s32.totalorder %s28, 1
      %p151 = por %p149, %p150
      %p152 = scmp.ne.s32.totalorder %s143, %s144
      %p153 = scmp.eq.s32.totalorder %s28, 0
      %p154 = por %p152, %p153
      %p155 = scmp.ne.s32.totalorder %s143, %s144
      %p156 = scmp.eq.s32.totalorder %s29, 1
      %p157 = por %p155, %p156
      %p159 = scmp.ne.s32.totalorder %s144, %s158
      %p160 = scmp.eq.s32.totalorder %s29, 0
      %p161 = por %p159, %p160
      %s163 = sadd.s32 %s162, 1
      %p166 = scmp.eq.s32.totalorder %s23, 1
      %p167 = scmp.ne.s32.totalorder %s162, %s164
      %p168 = scmp.eq.s32.totalorder %s23, 0
      %p169 = por %p167, %p168
      %p170 = scmp.ne.s32.totalorder %s162, %s164
      %p171 = scmp.eq.s32.totalorder %s28, 1
      %p172 = por %p170, %p171
      %p173 = scmp.ne.s32.totalorder %s164, %s165
      %p174 = scmp.eq.s32.totalorder %s28, 0
      %p175 = por %p173, %p174
      %p176 = scmp.ne.s32.totalorder %s164, %s165
      %p177 = scmp.eq.s32.totalorder %s29, 1
      %p178 = por %p176, %p177
      %p180 = scmp.ne.s32.totalorder %s165, %s179
      %p181 = scmp.eq.s32.totalorder %s29, 0
      %p182 = por %p180, %p181
      %s184 = sadd.s32 %s183, 1
      %p187 = scmp.eq.s32.totalorder %s23, 1
      %p188 = scmp.ne.s32.totalorder %s183, %s185
      %p189 = scmp.eq.s32.totalorder %s23, 0
      %p190 = por %p188, %p189
      %p191 = scmp.ne.s32.totalorder %s183, %s185
      %p192 = scmp.eq.s32.totalorder %s28, 1
      %p193 = por %p191, %p192
      %p194 = scmp.ne.s32.totalorder %s185, %s186
      %p195 = scmp.eq.s32.totalorder %s28, 0
      %p196 = por %p194, %p195
      %p197 = scmp.ne.s32.totalorder %s185, %s186
      %p198 = scmp.eq.s32.totalorder %s29, 1
      %p199 = por %p197, %p198
      %p201 = scmp.ne.s32.totalorder %s186, %s200
      %p202 = scmp.eq.s32.totalorder %s29, 0
      %p203 = por %p201, %p202
      %s205 = sadd.s32 %s204, 1
      %p208 = scmp.eq.s32.totalorder %s23, 1
      %p209 = scmp.ne.s32.totalorder %s204, %s206
      %p210 = scmp.eq.s32.totalorder %s23, 0
      %p211 = por %p209, %p210
      %p212 = scmp.ne.s32.totalorder %s204, %s206
      %p213 = scmp.eq.s32.totalorder %s28, 1
      %p214 = por %p212, %p213
      %p215 = scmp.ne.s32.totalorder %s206, %s207
      %p216 = scmp.eq.s32.totalorder %s28, 0
      %p217 = por %p215, %p216
      %p218 = scmp.ne.s32.totalorder %s206, %s207
      %p219 = scmp.eq.s32.totalorder %s29, 1
      %p220 = por %p218, %p219
      %p222 = scmp.ne.s32.totalorder %s207, %s221
      %p223 = scmp.eq.s32.totalorder %s29, 0
      %p224 = por %p222, %p223
      %s226 = sadd.s32 %s225, 1
      %p229 = scmp.eq.s32.totalorder %s23, 1
      %p230 = scmp.ne.s32.totalorder %s225, %s227
      %p231 = scmp.eq.s32.totalorder %s23, 0
      %p232 = por %p230, %p231
      %p233 = scmp.ne.s32.totalorder %s225, %s227
      %p234 = scmp.eq.s32.totalorder %s28, 1
      %p235 = por %p233, %p234
      %p236 = scmp.ne.s32.totalorder %s227, %s228
      %p237 = scmp.eq.s32.totalorder %s28, 0
      %p238 = por %p236, %p237
      %p239 = scmp.ne.s32.totalorder %s227, %s228
      %p240 = scmp.eq.s32.totalorder %s29, 1
      %p241 = por %p239, %p240
      %p243 = scmp.ne.s32.totalorder %s228, %s242
      %p244 = scmp.eq.s32.totalorder %s29, 0
      %p245 = por %p243, %p244
      %s247 = sadd.s32 %s246, 1
      %p250 = scmp.eq.s32.totalorder %s23, 1
      %p251 = scmp.ne.s32.totalorder %s246, %s248
      %p252 = scmp.eq.s32.totalorder %s23, 0
      %p253 = por %p251, %p252
      %p254 = scmp.ne.s32.totalorder %s246, %s248
      %p255 = scmp.eq.s32.totalorder %s28, 1
      %p256 = por %p254, %p255
      %p257 = scmp.ne.s32.totalorder %s248, %s249
      %p258 = scmp.eq.s32.totalorder %s28, 0
      %p259 = por %p257, %p258
      %p260 = scmp.ne.s32.totalorder %s248, %s249
      %p261 = scmp.eq.s32.totalorder %s29, 1
      %p262 = por %p260, %p261
      %p264 = scmp.ne.s32.totalorder %s249, %s263
      %p265 = scmp.eq.s32.totalorder %s29, 0
      %p266 = por %p264, %p265
      %s268 = sadd.s32 %s267, 1
      %p271 = scmp.eq.s32.totalorder %s23, 1
      %p272 = scmp.ne.s32.totalorder %s267, %s269
      %p273 = scmp.eq.s32.totalorder %s23, 0
      %p274 = por %p272, %p273
      %p275 = scmp.ne.s32.totalorder %s267, %s269
      %p276 = scmp.eq.s32.totalorder %s28, 1
      %p277 = por %p275, %p276
      %p278 = scmp.ne.s32.totalorder %s269, %s270
      %p279 = scmp.eq.s32.totalorder %s28, 0
      %p280 = por %p278, %p279
      %p281 = scmp.ne.s32.totalorder %s269, %s270
      %p282 = scmp.eq.s32.totalorder %s29, 1
      %p283 = por %p281, %p282
      %p285 = scmp.ne.s32.totalorder %s270, %s284
      %p286 = scmp.eq.s32.totalorder %s29, 0
      %p287 = por %p285, %p286
      %s288 = ssub.s32 %s23, %s30
      %p289 = scmp.eq.s32.totalorder %s288, 0
      %s291 = sadd.s32 %s290, 1
      %s292 = scalar_select %p289, %s290, %s291
      %p295 = pneg %p289
      %p296 = scmp.eq.s32.totalorder %s23, 1
      %p297 = por %p295, %p296
      %p298 = scmp.ne.s32.totalorder %s290, %s293
      %p299 = scmp.eq.s32.totalorder %s23, 0
      %p300 = por %p298, %p299
      %p301 = scmp.ne.s32.totalorder %s290, %s293
      %p302 = scmp.eq.s32.totalorder %s28, 1
      %p303 = por %p301, %p302
      %p304 = scmp.ne.s32.totalorder %s293, %s294
      %p305 = scmp.eq.s32.totalorder %s28, 0
      %p306 = por %p304, %p305
      %p307 = scmp.ne.s32.totalorder %s293, %s294
      %p308 = scmp.eq.s32.totalorder %s29, 1
      %p309 = por %p307, %p308
      %p311 = scmp.ne.s32.totalorder %s294, %s310
      %p312 = scmp.eq.s32.totalorder %s29, 0
      %p313 = por %p311, %p312
      %p314 = scmp.le.s32.totalorder 1, %s23
      %p315 = scmp.lt.s32.totalorder %s23, 3
      %p316 = pnand %p314, %p315
      %p317 = pneg %p316
      // Predicated region
      $region9: #{tpu_custom_call.1} parent=5 // pred_check
        _
      $region10: #{tpu_custom_call.1} parent=5 // pred_check_branch
        %319 = sbr.rel (%p316) target = $region12
      $region11: #{tpu_custom_call.1} parent=5 // pred_region
        %s320 = ssub.s32 %s23, 1
        // Predicated region
        $region13: #{tpu_custom_call.1} parent=11 // pred_check
          %p321 = pneg %p70
        $region14: #{tpu_custom_call.1} parent=11 // pred_check_branch
          %323 = sbr.rel (%p321) target = $region16
        $region15: #{tpu_custom_call.1} parent=11 // pred_region
          %s325 = ssub.s32 768, 768
          %326 = vsyncadd [#allocation3], %s325
          %s327 = sshll.u32 [#allocation2], 4
          %s328 = int_to_ptr.vmem [resolvable:$true] %s327
          %333 = dma.hbm_to_vmem [thread:$0]  %s1, 768, %s328, [#allocation3], 192, 192, 12
        $region16: #{tpu_custom_call.1} parent=11 // pred_fallthru
          _
        // Predicated region
        $region17: #{tpu_custom_call.1} parent=11 // pred_check
          %p334 = pneg %p91
        $region18: #{tpu_custom_call.1} parent=11 // pred_check_branch
          %336 = sbr.rel (%p334) target = $region20
        $region19: #{tpu_custom_call.1} parent=11 // pred_region
          _
        $region20: #{tpu_custom_call.1} parent=11 // pred_fallthru
          _
        // Predicated region
        $region21: #{tpu_custom_call.1} parent=11 // pred_check
          %p337 = pneg %p112
        $region22: #{tpu_custom_call.1} parent=11 // pred_check_branch
          %339 = sbr.rel (%p337) target = $region24
        $region23: #{tpu_custom_call.1} parent=11 // pred_region
          _
        $region24: #{tpu_custom_call.1} parent=11 // pred_fallthru
          _
        // Predicated region
        $region25: #{tpu_custom_call.1} parent=11 // pred_check
          %p340 = pneg %p133
        $region26: #{tpu_custom_call.1} parent=11 // pred_check_branch
          %342 = sbr.rel (%p340) target = $region28
        $region27: #{tpu_custom_call.1} parent=11 // pred_region
          _
        $region28: #{tpu_custom_call.1} parent=11 // pred_fallthru
          _
        // Predicated region
        $region29: #{tpu_custom_call.1} parent=11 // pred_check
          %p343 = pneg %p154
        $region30: #{tpu_custom_call.1} parent=11 // pred_check_branch
          %345 = sbr.rel (%p343) target = $region32
        $region31: #{tpu_custom_call.1} parent=11 // pred_region
          _
        $region32: #{tpu_custom_call.1} parent=11 // pred_fallthru
          _
        // Predicated region
        $region33: #{tpu_custom_call.1} parent=11 // pred_check
          %p346 = pneg %p175
        $region34: #{tpu_custom_call.1} parent=11 // pred_check_branch
          %348 = sbr.rel (%p346) target = $region36
        $region35: #{tpu_custom_call.1} parent=11 // pred_region
          %s350 = ssub.s32 256, 256
          %351 = vsyncadd [#allocation6], %s350
          %s352 = sshll.u32 [#allocation5], 4
          %s353 = int_to_ptr.vmem [resolvable:$true] %s352
          %358 = dma.hbm_to_vmem [thread:$0]  %s6, 256, %s353, [#allocation6], 64, 64, 4
        $region36: #{tpu_custom_call.1} parent=11 // pred_fallthru
          _
        // Predicated region
        $region37: #{tpu_custom_call.1} parent=11 // pred_check
          %p359 = pneg %p196
        $region38: #{tpu_custom_call.1} parent=11 // pred_check_branch
          %361 = sbr.rel (%p359) target = $region40
        $region39: #{tpu_custom_call.1} parent=11 // pred_region
          _
        $region40: #{tpu_custom_call.1} parent=11 // pred_fallthru
          _
        // Predicated region
        $region41: #{tpu_custom_call.1} parent=11 // pred_check
          %p362 = pneg %p217
        $region42: #{tpu_custom_call.1} parent=11 // pred_check_branch
          %364 = sbr.rel (%p362) target = $region44
        $region43: #{tpu_custom_call.1} parent=11 // pred_region
          _
        $region44: #{tpu_custom_call.1} parent=11 // pred_fallthru
          _
        // Predicated region
        $region45: #{tpu_custom_call.1} parent=11 // pred_check
          %p365 = pneg %p238
        $region46: #{tpu_custom_call.1} parent=11 // pred_check_branch
          %367 = sbr.rel (%p365) target = $region48
        $region47: #{tpu_custom_call.1} parent=11 // pred_region
          _
        $region48: #{tpu_custom_call.1} parent=11 // pred_fallthru
          _
        // Predicated region
        $region49: #{tpu_custom_call.1} parent=11 // pred_check
          %p368 = pneg %p259
        $region50: #{tpu_custom_call.1} parent=11 // pred_check_branch
          %370 = sbr.rel (%p368) target = $region52
        $region51: #{tpu_custom_call.1} parent=11 // pred_region
          _
        $region52: #{tpu_custom_call.1} parent=11 // pred_fallthru
          _
        // Predicated region
        $region53: #{tpu_custom_call.1} parent=11 // pred_check
          %p371 = pneg %p280
        $region54: #{tpu_custom_call.1} parent=11 // pred_check_branch
          %373 = sbr.rel (%p371) target = $region56
        $region55: #{tpu_custom_call.1} parent=11 // pred_region
          _
        $region56: #{tpu_custom_call.1} parent=11 // pred_fallthru
          _
      $region12: #{tpu_custom_call.1} parent=5 // pred_fallthru
        _
      %p374 = scmp.lt.s32.totalorder %s23, 2
      // Predicated region
      $region57: #{tpu_custom_call.1} parent=5 // pred_check
        %p375 = pneg %p374
      $region58: #{tpu_custom_call.1} parent=5 // pred_check_branch
        %377 = sbr.rel (%p375) target = $region60
      $region59: #{tpu_custom_call.1} parent=5 // pred_region
        // Predicated region
        $region61: #{tpu_custom_call.1} parent=59 // pred_check
          %p378 = pneg %p43
        $region62: #{tpu_custom_call.1} parent=59 // pred_check_branch
          %380 = sbr.rel (%p378) target = $region64
        $region63: #{tpu_custom_call.1} parent=59 // pred_region
          %p381 = scmp.lt.s32.totalorder %s23, 1
          %s382 = scalar_select %p381, %s23, 1
          %s383 = smul.addr %s382, 8
          %s384 = scalar_lea.vmem %s0, %s383
        $region64: #{tpu_custom_call.1} parent=59 // pred_fallthru
          _
      $region60: #{tpu_custom_call.1} parent=5 // pred_fallthru
        _
      %p385 = scmp.le.s32.totalorder 1, %s23
      %p386 = scmp.lt.s32.totalorder %s23, 3
      %p387 = pnand %p385, %p386
      %p388 = pneg %p387
      // Predicated region
      $region65: #{tpu_custom_call.1} parent=5 // pred_check
        _
      $region66: #{tpu_custom_call.1} parent=5 // pred_check_branch
        %390 = sbr.rel (%p387) target = $region68
      $region67: #{tpu_custom_call.1} parent=5 // pred_region
        %s391 = ssub.s32 %s23, 1
        // Predicated region
        $region69: #{tpu_custom_call.1} parent=67 // pred_check
          %p392 = pneg %p70
        $region70: #{tpu_custom_call.1} parent=67 // pred_check_branch
          %394 = sbr.rel (%p392) target = $region72
        $region71: #{tpu_custom_call.1} parent=67 // pred_region
          %395 = dma.done [#allocation3], 768
        $region72: #{tpu_custom_call.1} parent=67 // pred_fallthru
          _
        // Predicated region
        $region73: #{tpu_custom_call.1} parent=67 // pred_check
          %p396 = pneg %p175
        $region74: #{tpu_custom_call.1} parent=67 // pred_check_branch
          %398 = sbr.rel (%p396) target = $region76
        $region75: #{tpu_custom_call.1} parent=67 // pred_region
          %399 = dma.done [#allocation6], 256
        $region76: #{tpu_custom_call.1} parent=67 // pred_fallthru
          _
        %p400 = scmp.lt.s32.totalorder %s28, 1
        %s401 = scalar_select %p400, %s28, 1
        %s402 = smul.addr %s401, 8
        %s403 = scalar_lea.vmem %s0, %s402
        %p404 = pneg %p49
        %p405 = pneg %p46
        %p406 = pneg %p70
        %p407 = pneg %p67
        %p408 = pneg %p91
        %p409 = pneg %p88
        %p410 = pneg %p112
        %p411 = pneg %p109
        %p412 = pneg %p133
        %p413 = pneg %p130
        %p414 = pneg %p154
        %p415 = pneg %p151
        %p416 = pneg %p175
        %p417 = pneg %p172
        %p418 = pneg %p196
        %p419 = pneg %p193
        %p420 = pneg %p217
        %p421 = pneg %p214
        %p422 = pneg %p238
        %p423 = pneg %p235
        %p424 = pneg %p259
        %p425 = pneg %p256
        %p426 = pneg %p280
        %p427 = pneg %p277
        %p428 = pneg %p306
        %p429 = pneg %p303
        %s430 = sand.u32 %s293, 1
        %s431 = scalar_lea.sflag [#allocation4], %s430
        %s432 = sand.u32 %s293, 1
        %s433 = smul.addr %s432, 8
        %s434 = scalar_lea.vmem [#allocation7], %s433
        %p435 = scmp.lt.s32.totalorder %s28, 1
        %s436 = scalar_select %p435, %s28, 1
        %s437 = smul.addr %s436, 8
        %s438 = scalar_lea.vmem %s0, %s437
        %v440 = vld [vmem:[%s438] sm:$0xff]
        %v441 = vpack.c.bf16 %v440, %v440
        %v442 = vld [vmem:[#allocation2] sm:$0xff]
        %v443 = vld [vmem:[#allocation2 + $0x8] sm:$0xf]
        %v444 = vld [vmem:[#allocation2 + $0xc] sm:$0xff]
        %v445 = vld [vmem:[#allocation2 + $0x14] sm:$0xf]
        %v446 = vld [vmem:[#allocation2 + $0x18] sm:$0xff]
        %v447 = vld [vmem:[#allocation2 + $0x20] sm:$0xf]
        %v448 = vld [vmem:[#allocation2 + $0x24] sm:$0xff]
        %v449 = vld [vmem:[#allocation2 + $0x2c] sm:$0xf]
        %v458 = vunpack.c.l.b16 %v442
        %v459 = vunpack.c.h.b16 %v442
        %v460 = vunpack.c.l.b16 %v443
        %v461 = vunpack.c.l.b16 %v444
        %v462 = vunpack.c.h.b16 %v444
        %v463 = vunpack.c.l.b16 %v445
        %v464 = vunpack.c.l.b16 %v446
        %v465 = vunpack.c.h.b16 %v446
        %v466 = vunpack.c.l.b16 %v447
        %v467 = vunpack.c.l.b16 %v448
        %v468 = vunpack.c.h.b16 %v448
        %v469 = vunpack.c.l.b16 %v449
        %v470 = vpack.c.b16 %v461, %v458
        %v471 = vpack.c.b16 %v462, %v459
        %v472 = vpack.c.b16 %v463, %v460
        %v473 = vpack.c.b16 %v467, %v464
        %v474 = vpack.c.b16 %v468, %v465
        %v475 = vpack.c.b16 %v469, %v466
        %vm482 = vcmask 261120
        %v484 = vsel %vm482, %v441, 0
        %486 = vmatprep.subr.bf16.mxu0 %v471
        %487 = vmatpush1.bf16.msra.mxu0 %v470
        %488 = vmatprep.subr.bf16.mxu0 %v474
        %489 = vmatpush1.bf16.msra.mxu0 %v473
        %490 = vmatprep.subr.bf16.mxu0 0
        %491 = vmatpush1.bf16.msra.mxu0 0
        %492 = vmatprep.subr.bf16.mxu0 0
        %493 = vmatpush1.bf16.msra.mxu0 0
        %494 = vmatprep.subr.bf16.mxu0 0
        %495 = vmatpush1.bf16.msra.mxu0 0
        %496 = vmatprep.subr.bf16.mxu0 0
        %497 = vmatpush1.bf16.msra.mxu0 0
        %498 = vmatprep.subr.bf16.mxu0 0
        %499 = vmatpush1.bf16.msra.mxu0 0
        %500 = vmatprep.subr.bf16.mxu0 0
        %501 = vmatpush1.bf16.msra.mxu0 0
        %502 = vmatprep.subr.bf16.mxu0 0
        %503 = vmatpush1.bf16.msra.mxu0 0
        %504 = vmatprep.subr.bf16.mxu0 0
        %505 = vmatpush1.bf16.msra.mxu0 0
        %506 = vmatprep.subr.bf16.mxu0 0
        %507 = vmatpush1.bf16.msra.mxu0 0
        %508 = vmatprep.subr.bf16.mxu0 0
        %509 = vmatpush1.bf16.msra.mxu0 0
        %510 = vmatprep.subr.bf16.mxu0 0
        %511 = vmatpush1.bf16.msra.mxu0 0
        %512 = vmatprep.subr.bf16.mxu0 0
        %513 = vmatpush1.bf16.msra.mxu0 0
        %514 = vmatprep.subr.bf16.mxu0 0
        %515 = vmatpush1.bf16.msra.mxu0 0
        %516 = vmatprep.subr.bf16.mxu0 0
        %517 = vmatpush1.bf16.msra.mxu0 0
        %518 = vmatprep.mubr.bf16.mxu0 0
        %519 = vmatmul.mubr.bf16.gmra.mrb[0].mxu0 %v484
        %v520 = vpop.f32.mrb[0].mxu0
        %v521 = vadd.f32 0.0, %v520
        %v522 = vpop.f32.mrb[0].mxu0
        %v523 = vadd.f32 0.0, %v522
        %v524 = vpop.f32.mrb[0].mxu0
        %v525 = vpop.f32.mrb[0].mxu0
        %526 = vdwg.mxu0
        %527 = vmatprep.subr.bf16.mxu0 0
        %528 = vmatpush1.bf16.msra.mxu0 %v472
        %529 = vmatprep.subr.bf16.mxu0 0
        %530 = vmatpush1.bf16.msra.mxu0 %v475
        %531 = vmatprep.subr.bf16.mxu0 0
        %532 = vmatpush1.bf16.msra.mxu0 0
        %533 = vmatprep.subr.bf16.mxu0 0
        %534 = vmatpush1.bf16.msra.mxu0 0
        %535 = vmatprep.subr.bf16.mxu0 0
        %536 = vmatpush1.bf16.msra.mxu0 0
        %537 = vmatprep.subr.bf16.mxu0 0
        %538 = vmatpush1.bf16.msra.mxu0 0
        %539 = vmatprep.subr.bf16.mxu0 0
        %540 = vmatpush1.bf16.msra.mxu0 0
        %541 = vmatprep.subr.bf16.mxu0 0
        %542 = vmatpush1.bf16.msra.mxu0 0
        %543 = vmatprep.subr.bf16.mxu0 0
        %544 = vmatpush1.bf16.msra.mxu0 0
        %545 = vmatprep.subr.bf16.mxu0 0
        %546 = vmatpush1.bf16.msra.mxu0 0
        %547 = vmatprep.subr.bf16.mxu0 0
        %548 = vmatpush1.bf16.msra.mxu0 0
        %549 = vmatprep.subr.bf16.mxu0 0
        %550 = vmatpush1.bf16.msra.mxu0 0
        %551 = vmatprep.subr.bf16.mxu0 0
        %552 = vmatpush1.bf16.msra.mxu0 0
        %553 = vmatprep.subr.bf16.mxu0 0
        %554 = vmatpush1.bf16.msra.mxu0 0
        %555 = vmatprep.subr.bf16.mxu0 0
        %556 = vmatpush1.bf16.msra.mxu0 0
        %557 = vmatprep.subr.bf16.mxu0 0
        %558 = vmatpush1.bf16.msra.mxu0 0
        %559 = vmatprep.mubr.bf16.mxu0 0
        %560 = vmatmul.mubr.bf16.gmra.mrb[0].mxu0 %v484
        %v561 = vpop.f32.mrb[0].mxu0
        %v562 = vadd.f32 0.0, %v561
        %v563 = vpop.f32.mrb[0].mxu0
        %v564 = vpop.f32.mrb[0].mxu0
        %v565 = vpop.f32.mrb[0].mxu0
        %566 = vdwg.mxu0
        %v567 = vpack.c.bf16 %v521, %v521
        %v568 = vpack.c.bf16 %v523, %v523
        %v569 = vpack.c.bf16 %v562, %v562
        %v571 = vsel %vm482, %v567, 0
        %v574 = vsel %vm482, %v568, 0
        %576 = vmatprep.subr.bf16.mxu0 0
        %577 = vmatpush1.bf16.xpose.msra.mxu0 %v574
        %578 = vmatprep.subr.bf16.mxu0 0
        %579 = vmatpush1.bf16.xpose.msra.mxu0 0
        %580 = vmatprep.subr.bf16.mxu0 0
        %581 = vmatpush1.bf16.xpose.msra.mxu0 0
        %582 = vmatprep.subr.bf16.mxu0 0
        %583 = vmatpush1.bf16.xpose.msra.mxu0 0
        %584 = vmatprep.subr.bf16.mxu0 0
        %585 = vmatpush1.bf16.xpose.msra.mxu0 0
        %586 = vmatprep.subr.bf16.mxu0 0
        %587 = vmatpush1.bf16.xpose.msra.mxu0 0
        %588 = vmatprep.subr.bf16.mxu0 0
        %589 = vmatpush1.bf16.xpose.msra.mxu0 0
        %590 = vmatprep.subr.bf16.mxu0 0
        %591 = vmatpush1.bf16.xpose.msra.mxu0 0
        %592 = vmatprep.subr.bf16.mxu0 0
        %593 = vmatpush1.bf16.xpose.msra.mxu0 0
        %594 = vmatprep.subr.bf16.mxu0 0
        %595 = vmatpush1.bf16.xpose.msra.mxu0 0
        %596 = vmatprep.subr.bf16.mxu0 0
        %597 = vmatpush1.bf16.xpose.msra.mxu0 0
        %598 = vmatprep.subr.bf16.mxu0 0
        %599 = vmatpush1.bf16.xpose.msra.mxu0 0
        %600 = vmatprep.subr.bf16.mxu0 0
        %601 = vmatpush1.bf16.xpose.msra.mxu0 0
        %602 = vmatprep.subr.bf16.mxu0 0
        %603 = vmatpush1.bf16.xpose.msra.mxu0 0
        %604 = vmatprep.subr.bf16.mxu0 0
        %605 = vmatpush1.bf16.xpose.msra.mxu0 0
        %606 = vmatprep.subr.bf16.mxu0 0
        %607 = vmatpush1.bf16.xpose.msra.mxu0 0
        %608 = vmatprep.mubr.bf16.mxu0 0
        %609 = vmatmul.mubr.bf16.gmra.mrb[0].mxu0 %v571
        %v610 = vpop.f32.mrb[0].mxu0
        %v611 = vadd.f32 0.0, %v610
        %v612 = vpop.f32.mrb[0].mxu0
        %v613 = vpop.f32.mrb[0].mxu0
        %v614 = vpop.f32.mrb[0].mxu0
        %615 = vdwg.mxu0
        %v616 = vmul.f32 %v611, 0.17677669
        %vm617 = vcmask 64512
        %v618 = vsel %vm617, %v616, -inf
        %619 = vmax.xlane.f32.xlu0 %v618
        %v620 = vpop.xlane.xlu0 %619
        %v621 = vsub.f32 %v616, %v620
        %v622 = vmul.f32 %v621, 1.442695
        %v623 = vpow.pop %v622
        %v624 = vsel %vm617, %v623, 0.0
        %625 = vadd.xlane.f32.xlu0 %v624
        %v626 = vpop.xlane.xlu0 %625
        %v627 = vrcp.pop %v626
        %v628 = vmul.f32 %v623, %v627
        %v629 = vpack.c.bf16 %v628, %v628
        %v631 = vsel %vm617, %v629, 0
        %vm633 = vcmask 1043456
        %v635 = vsel %vm633, %v569, 0
        %637 = vmatprep.subr.bf16.mxu0 0
        %638 = vmatpush1.bf16.msra.mxu0 %v635
        %639 = vmatprep.subr.bf16.mxu0 0
        %640 = vmatpush1.bf16.msra.mxu0 0
        %641 = vmatprep.subr.bf16.mxu0 0
        %642 = vmatpush1.bf16.msra.mxu0 0
        %643 = vmatprep.subr.bf16.mxu0 0
        %644 = vmatpush1.bf16.msra.mxu0 0
        %645 = vmatprep.subr.bf16.mxu0 0
        %646 = vmatpush1.bf16.msra.mxu0 0
        %647 = vmatprep.subr.bf16.mxu0 0
        %648 = vmatpush1.bf16.msra.mxu0 0
        %649 = vmatprep.subr.bf16.mxu0 0
        %650 = vmatpush1.bf16.msra.mxu0 0
        %651 = vmatprep.subr.bf16.mxu0 0
        %652 = vmatpush1.bf16.msra.mxu0 0
        %653 = vmatprep.subr.bf16.mxu0 0
        %654 = vmatpush1.bf16.msra.mxu0 0
        %655 = vmatprep.subr.bf16.mxu0 0
        %656 = vmatpush1.bf16.msra.mxu0 0
        %657 = vmatprep.subr.bf16.mxu0 0
        %658 = vmatpush1.bf16.msra.mxu0 0
        %659 = vmatprep.subr.bf16.mxu0 0
        %660 = vmatpush1.bf16.msra.mxu0 0
        %661 = vmatprep.subr.bf16.mxu0 0
        %662 = vmatpush1.bf16.msra.mxu0 0
        %663 = vmatprep.subr.bf16.mxu0 0
        %664 = vmatpush1.bf16.msra.mxu0 0
        %665 = vmatprep.subr.bf16.mxu0 0
        %666 = vmatpush1.bf16.msra.mxu0 0
        %667 = vmatprep.subr.bf16.mxu0 0
        %668 = vmatpush1.bf16.msra.mxu0 0
        %669 = vmatprep.mubr.bf16.mxu0 0
        %670 = vmatmul.mubr.bf16.gmra.mrb[0].mxu0 %v631
        %v671 = vpop.f32.mrb[0].mxu0
        %v672 = vadd.f32 0.0, %v671
        %v673 = vpop.f32.mrb[0].mxu0
        %v674 = vpop.f32.mrb[0].mxu0
        %v675 = vpop.f32.mrb[0].mxu0
        %676 = vdwg.mxu0
        %v677 = vpack.c.bf16 %v672, %v672
        %v678 = vld [vmem:[%s2] sm:$0xf]
        %v679 = vld [vmem:[%s2 + $0x4] sm:$0xf]
        %v680 = vld [vmem:[%s2 + $0x8] sm:$0xf]
        %v681 = vld [vmem:[%s2 + $0xc] sm:$0xf]
        %683 = vrot.lane.b32.xlu0 %v567, 96
        %v684 = vpop.permute.xlu0 %683
        %686 = vrot.lane.b32.xlu0 %v568, 96
        %v687 = vpop.permute.xlu0 %686
        %v689 = vsel %vm482, %v684, 0
        %v692 = vsel %vm482, %v687, 0
        %694 = vmatprep.subr.bf16.mxu0 0
        %695 = vmatpush1.bf16.xpose.msra.mxu0 %v692
        %696 = vmatprep.subr.bf16.mxu0 0
        %697 = vmatpush1.bf16.xpose.msra.mxu0 0
        %698 = vmatprep.subr.bf16.mxu0 0
        %699 = vmatpush1.bf16.xpose.msra.mxu0 0
        %700 = vmatprep.subr.bf16.mxu0 0
        %701 = vmatpush1.bf16.xpose.msra.mxu0 0
        %702 = vmatprep.subr.bf16.mxu0 0
        %703 = vmatpush1.bf16.xpose.msra.mxu0 0
        %704 = vmatprep.subr.bf16.mxu0 0
        %705 = vmatpush1.bf16.xpose.msra.mxu0 0
        %706 = vmatprep.subr.bf16.mxu0 0
        %707 = vmatpush1.bf16.xpose.msra.mxu0 0
        %708 = vmatprep.subr.bf16.mxu0 0
        %709 = vmatpush1.bf16.xpose.msra.mxu0 0
        %710 = vmatprep.subr.bf16.mxu0 0
        %711 = vmatpush1.bf16.xpose.msra.mxu0 0
        %712 = vmatprep.subr.bf16.mxu0 0
        %713 = vmatpush1.bf16.xpose.msra.mxu0 0
        %714 = vmatprep.subr.bf16.mxu0 0
        %715 = vmatpush1.bf16.xpose.msra.mxu0 0
        %716 = vmatprep.subr.bf16.mxu0 0
        %717 = vmatpush1.bf16.xpose.msra.mxu0 0
        %718 = vmatprep.subr.bf16.mxu0 0
        %719 = vmatpush1.bf16.xpose.msra.mxu0 0
        %720 = vmatprep.subr.bf16.mxu0 0
        %721 = vmatpush1.bf16.xpose.msra.mxu0 0
        %722 = vmatprep.subr.bf16.mxu0 0
        %723 = vmatpush1.bf16.xpose.msra.mxu0 0
        %724 = vmatprep.subr.bf16.mxu0 0
        %725 = vmatpush1.bf16.xpose.msra.mxu0 0
        %726 = vmatprep.mubr.bf16.mxu0 0
        %727 = vmatmul.mubr.bf16.gmra.mrb[0].mxu0 %v689
        %v728 = vpop.f32.mrb[0].mxu0
        %v729 = vadd.f32 0.0, %v728
        %v730 = vpop.f32.mrb[0].mxu0
        %v731 = vpop.f32.mrb[0].mxu0
        %v732 = vpop.f32.mrb[0].mxu0
        %733 = vdwg.mxu0
        %v734 = vmul.f32 %v729, 0.17677669
        %v735 = vsel %vm617, %v734, -inf
        %736 = vmax.xlane.f32.xlu0 %v735
        %v737 = vpop.xlane.xlu0 %736
        %v738 = vsub.f32 %v734, %v737
        %v739 = vmul.f32 %v738, 1.442695
        %v740 = vpow.pop %v739
        %v741 = vsel %vm617, %v740, 0.0
        %742 = vadd.xlane.f32.xlu0 %v741
        %v743 = vpop.xlane.xlu0 %742
        %v744 = vrcp.pop %v743
        %v745 = vmul.f32 %v740, %v744
        %v746 = vpack.c.bf16 %v745, %v745
        %748 = vrot.lane.b32.xlu0 %v569, 96
        %v749 = vpop.permute.xlu0 %748
        %v751 = vsel %vm617, %v746, 0
        %v754 = vsel %vm633, %v749, 0
        %756 = vmatprep.subr.bf16.mxu0 0
        %757 = vmatpush1.bf16.msra.mxu0 %v754
        %758 = vmatprep.subr.bf16.mxu0 0
        %759 = vmatpush1.bf16.msra.mxu0 0
        %760 = vmatprep.subr.bf16.mxu0 0
        %761 = vmatpush1.bf16.msra.mxu0 0
        %762 = vmatprep.subr.bf16.mxu0 0
        %763 = vmatpush1.bf16.msra.mxu0 0
        %764 = vmatprep.subr.bf16.mxu0 0
        %765 = vmatpush1.bf16.msra.mxu0 0
        %766 = vmatprep.subr.bf16.mxu0 0
        %767 = vmatpush1.bf16.msra.mxu0 0
        %768 = vmatprep.subr.bf16.mxu0 0
        %769 = vmatpush1.bf16.msra.mxu0 0
        %770 = vmatprep.subr.bf16.mxu0 0
        %771 = vmatpush1.bf16.msra.mxu0 0
        %772 = vmatprep.subr.bf16.mxu0 0
        %773 = vmatpush1.bf16.msra.mxu0 0
        %774 = vmatprep.subr.bf16.mxu0 0
        %775 = vmatpush1.bf16.msra.mxu0 0
        %776 = vmatprep.subr.bf16.mxu0 0
        %777 = vmatpush1.bf16.msra.mxu0 0
        %778 = vmatprep.subr.bf16.mxu0 0
        %779 = vmatpush1.bf16.msra.mxu0 0
        %780 = vmatprep.subr.bf16.mxu0 0
        %781 = vmatpush1.bf16.msra.mxu0 0
        %782 = vmatprep.subr.bf16.mxu0 0
        %783 = vmatpush1.bf16.msra.mxu0 0
        %784 = vmatprep.subr.bf16.mxu0 0
        %785 = vmatpush1.bf16.msra.mxu0 0
        %786 = vmatprep.subr.bf16.mxu0 0
        %787 = vmatpush1.bf16.msra.mxu0 0
        %788 = vmatprep.mubr.bf16.mxu0 0
        %789 = vmatmul.mubr.bf16.gmra.mrb[0].mxu0 %v751
        %v790 = vpop.f32.mrb[0].mxu0
        %v791 = vadd.f32 0.0, %v790
        %v792 = vpop.f32.mrb[0].mxu0
        %v793 = vpop.f32.mrb[0].mxu0
        %v794 = vpop.f32.mrb[0].mxu0
        %795 = vdwg.mxu0
        %v796 = vpack.c.bf16 %v791, %v791
        %s797 = scalar_lea.vmem %s2, 16
        %v798 = vld [vmem:[%s797] sm:$0xf]
        %v799 = vld [vmem:[%s797 + $0x4] sm:$0xf]
        %v800 = vld [vmem:[%s797 + $0x8] sm:$0xf]
        %v801 = vld [vmem:[%s797 + $0xc] sm:$0xf]
        %v806 = vunpack.c.l.b16 %v798
        %v807 = vunpack.c.l.b16 %v799
        %v808 = vunpack.c.l.b16 %v800
        %v809 = vunpack.c.l.b16 %v801
        %v810 = vpack.c.b16 %v807, %v806
        %v811 = vpack.c.b16 %v809, %v808
        %v815 = vsel %vm482, %v796, 0
        %817 = vmatprep.subr.bf16.mxu0 0
        %818 = vmatpush1.bf16.msra.mxu0 %v810
        %819 = vmatprep.subr.bf16.mxu0 0
        %820 = vmatpush1.bf16.msra.mxu0 %v811
        %821 = vmatprep.subr.bf16.mxu0 0
        %822 = vmatpush1.bf16.msra.mxu0 0
        %823 = vmatprep.subr.bf16.mxu0 0
        %824 = vmatpush1.bf16.msra.mxu0 0
        %825 = vmatprep.subr.bf16.mxu0 0
        %826 = vmatpush1.bf16.msra.mxu0 0
        %827 = vmatprep.subr.bf16.mxu0 0
        %828 = vmatpush1.bf16.msra.mxu0 0
        %829 = vmatprep.subr.bf16.mxu0 0
        %830 = vmatpush1.bf16.msra.mxu0 0
        %831 = vmatprep.subr.bf16.mxu0 0
        %832 = vmatpush1.bf16.msra.mxu0 0
        %833 = vmatprep.subr.bf16.mxu0 0
        %834 = vmatpush1.bf16.msra.mxu0 0
        %835 = vmatprep.subr.bf16.mxu0 0
        %836 = vmatpush1.bf16.msra.mxu0 0
        %837 = vmatprep.subr.bf16.mxu0 0
        %838 = vmatpush1.bf16.msra.mxu0 0
        %839 = vmatprep.subr.bf16.mxu0 0
        %840 = vmatpush1.bf16.msra.mxu0 0
        %841 = vmatprep.subr.bf16.mxu0 0
        %842 = vmatpush1.bf16.msra.mxu0 0
        %843 = vmatprep.subr.bf16.mxu0 0
        %844 = vmatpush1.bf16.msra.mxu0 0
        %845 = vmatprep.subr.bf16.mxu0 0
        %846 = vmatpush1.bf16.msra.mxu0 0
        %847 = vmatprep.subr.bf16.mxu0 0
        %848 = vmatpush1.bf16.msra.mxu0 0
        %849 = vmatprep.mubr.bf16.mxu0 0
        %850 = vmatmul.mubr.bf16.gmra.mrb[0].mxu0 %v815
        %v851 = vpop.f32.mrb[0].mxu0
        %v852 = vadd.f32 0.0, %v851
        %v853 = vpop.f32.mrb[0].mxu0
        %v854 = vpop.f32.mrb[0].mxu0
        %v855 = vpop.f32.mrb[0].mxu0
        %856 = vdwg.mxu0
        %v861 = vunpack.c.l.b16 %v678
        %v862 = vunpack.c.l.b16 %v679
        %v863 = vunpack.c.l.b16 %v680
        %v864 = vunpack.c.l.b16 %v681
        %v865 = vpack.c.b16 %v862, %v861
        %v866 = vpack.c.b16 %v864, %v863
        %v870 = vsel %vm482, %v677, 0
        %872 = vmatprep.subr.bf16.mxu0 0
        %873 = vmatpush1.bf16.msra.mxu0 %v865
        %874 = vmatprep.subr.bf16.mxu0 0
        %875 = vmatpush1.bf16.msra.mxu0 %v866
        %876 = vmatprep.subr.bf16.mxu0 0
        %877 = vmatpush1.bf16.msra.mxu0 0
        %878 = vmatprep.subr.bf16.mxu0 0
        %879 = vmatpush1.bf16.msra.mxu0 0
        %880 = vmatprep.subr.bf16.mxu0 0
        %881 = vmatpush1.bf16.msra.mxu0 0
        %882 = vmatprep.subr.bf16.mxu0 0
        %883 = vmatpush1.bf16.msra.mxu0 0
        %884 = vmatprep.subr.bf16.mxu0 0
        %885 = vmatpush1.bf16.msra.mxu0 0
        %886 = vmatprep.subr.bf16.mxu0 0
        %887 = vmatpush1.bf16.msra.mxu0 0
        %888 = vmatprep.subr.bf16.mxu0 0
        %889 = vmatpush1.bf16.msra.mxu0 0
        %890 = vmatprep.subr.bf16.mxu0 0
        %891 = vmatpush1.bf16.msra.mxu0 0
        %892 = vmatprep.subr.bf16.mxu0 0
        %893 = vmatpush1.bf16.msra.mxu0 0
        %894 = vmatprep.subr.bf16.mxu0 0
        %895 = vmatpush1.bf16.msra.mxu0 0
        %896 = vmatprep.subr.bf16.mxu0 0
        %897 = vmatpush1.bf16.msra.mxu0 0
        %898 = vmatprep.subr.bf16.mxu0 0
        %899 = vmatpush1.bf16.msra.mxu0 0
        %900 = vmatprep.subr.bf16.mxu0 0
        %901 = vmatpush1.bf16.msra.mxu0 0
        %902 = vmatprep.subr.bf16.mxu0 0
        %903 = vmatpush1.bf16.msra.mxu0 0
        %904 = vmatprep.mubr.bf16.mxu0 0
        %905 = vmatmul.mubr.bf16.gmra.mrb[0].mxu0 %v870
        %v906 = vpop.f32.mrb[0].mxu0
        %v907 = vadd.f32 %v852, %v906
        %v908 = vpop.f32.mrb[0].mxu0
        %v909 = vpop.f32.mrb[0].mxu0
        %v910 = vpop.f32.mrb[0].mxu0
        %911 = vdwg.mxu0
        %912 = vrot.lane.b32.xlu0 %v567, 64
        %v913 = vpop.permute.xlu0 %912
        %914 = vrot.lane.b32.xlu0 %v568, 64
        %v915 = vpop.permute.xlu0 %914
        %v917 = vsel %vm482, %v913, 0
        %v920 = vsel %vm482, %v915, 0
        %922 = vmatprep.subr.bf16.mxu0 0
        %923 = vmatpush1.bf16.xpose.msra.mxu0 %v920
        %924 = vmatprep.subr.bf16.mxu0 0
        %925 = vmatpush1.bf16.xpose.msra.mxu0 0
        %926 = vmatprep.subr.bf16.mxu0 0
        %927 = vmatpush1.bf16.xpose.msra.mxu0 0
        %928 = vmatprep.subr.bf16.mxu0 0
        %929 = vmatpush1.bf16.xpose.msra.mxu0 0
        %930 = vmatprep.subr.bf16.mxu0 0
        %931 = vmatpush1.bf16.xpose.msra.mxu0 0
        %932 = vmatprep.subr.bf16.mxu0 0
        %933 = vmatpush1.bf16.xpose.msra.mxu0 0
        %934 = vmatprep.subr.bf16.mxu0 0
        %935 = vmatpush1.bf16.xpose.msra.mxu0 0
        %936 = vmatprep.subr.bf16.mxu0 0
        %937 = vmatpush1.bf16.xpose.msra.mxu0 0
        %938 = vmatprep.subr.bf16.mxu0 0
        %939 = vmatpush1.bf16.xpose.msra.mxu0 0
        %940 = vmatprep.subr.bf16.mxu0 0
        %941 = vmatpush1.bf16.xpose.msra.mxu0 0
        %942 = vmatprep.subr.bf16.mxu0 0
        %943 = vmatpush1.bf16.xpose.msra.mxu0 0
        %944 = vmatprep.subr.bf16.mxu0 0
        %945 = vmatpush1.bf16.xpose.msra.mxu0 0
        %946 = vmatprep.subr.bf16.mxu0 0
        %947 = vmatpush1.bf16.xpose.msra.mxu0 0
        %948 = vmatprep.subr.bf16.mxu0 0
        %949 = vmatpush1.bf16.xpose.msra.mxu0 0
        %950 = vmatprep.subr.bf16.mxu0 0
        %951 = vmatpush1.bf16.xpose.msra.mxu0 0
        %952 = vmatprep.subr.bf16.mxu0 0
        %953 = vmatpush1.bf16.xpose.msra.mxu0 0
        %954 = vmatprep.mubr.bf16.mxu0 0
        %955 = vmatmul.mubr.bf16.gmra.mrb[0].mxu0 %v917
        %v956 = vpop.f32.mrb[0].mxu0
        %v957 = vadd.f32 0.0, %v956
        %v958 = vpop.f32.mrb[0].mxu0
        %v959 = vpop.f32.mrb[0].mxu0
        %v960 = vpop.f32.mrb[0].mxu0
        %961 = vdwg.mxu0
        %v962 = vmul.f32 %v957, 0.17677669
        %v963 = vsel %vm617, %v962, -inf
        %964 = vmax.xlane.f32.xlu0 %v963
        %v965 = vpop.xlane.xlu0 %964
        %v966 = vsub.f32 %v962, %v965
        %v967 = vmul.f32 %v966, 1.442695
        %v968 = vpow.pop %v967
        %v969 = vsel %vm617, %v968, 0.0
        %970 = vadd.xlane.f32.xlu0 %v969
        %v971 = vpop.xlane.xlu0 %970
        %v972 = vrcp.pop %v971
        %v973 = vmul.f32 %v968, %v972
        %v974 = vpack.c.bf16 %v973, %v973
        %975 = vrot.lane.b32.xlu0 %v569, 64
        %v976 = vpop.permute.xlu0 %975
        %v978 = vsel %vm617, %v974, 0
        %v981 = vsel %vm633, %v976, 0
        %983 = vmatprep.subr.bf16.mxu0 0
        %984 = vmatpush1.bf16.msra.mxu0 %v981
        %985 = vmatprep.subr.bf16.mxu0 0
        %986 = vmatpush1.bf16.msra.mxu0 0
        %987 = vmatprep.subr.bf16.mxu0 0
        %988 = vmatpush1.bf16.msra.mxu0 0
        %989 = vmatprep.subr.bf16.mxu0 0
        %990 = vmatpush1.bf16.msra.mxu0 0
        %991 = vmatprep.subr.bf16.mxu0 0
        %992 = vmatpush1.bf16.msra.mxu0 0
        %993 = vmatprep.subr.bf16.mxu0 0
        %994 = vmatpush1.bf16.msra.mxu0 0
        %995 = vmatprep.subr.bf16.mxu0 0
        %996 = vmatpush1.bf16.msra.mxu0 0
        %997 = vmatprep.subr.bf16.mxu0 0
        %998 = vmatpush1.bf16.msra.mxu0 0
        %999 = vmatprep.subr.bf16.mxu0 0
        %1000 = vmatpush1.bf16.msra.mxu0 0
        %1001 = vmatprep.subr.bf16.mxu0 0
        %1002 = vmatpush1.bf16.msra.mxu0 0
        %1003 = vmatprep.subr.bf16.mxu0 0
        %1004 = vmatpush1.bf16.msra.mxu0 0
        %1005 = vmatprep.subr.bf16.mxu0 0
        %1006 = vmatpush1.bf16.msra.mxu0 0
        %1007 = vmatprep.subr.bf16.mxu0 0
        %1008 = vmatpush1.bf16.msra.mxu0 0
        %1009 = vmatprep.subr.bf16.mxu0 0
        %1010 = vmatpush1.bf16.msra.mxu0 0
        %1011 = vmatprep.subr.bf16.mxu0 0
        %1012 = vmatpush1.bf16.msra.mxu0 0
        %1013 = vmatprep.subr.bf16.mxu0 0
        %1014 = vmatpush1.bf16.msra.mxu0 0
        %1015 = vmatprep.mubr.bf16.mxu0 0
        %1016 = vmatmul.mubr.bf16.gmra.mrb[0].mxu0 %v978
        %v1017 = vpop.f32.mrb[0].mxu0
        %v1018 = vadd.f32 0.0, %v1017
        %v1019 = vpop.f32.mrb[0].mxu0
        %v1020 = vpop.f32.mrb[0].mxu0
        %v1021 = vpop.f32.mrb[0].mxu0
        %1022 = vdwg.mxu0
        %v1023 = vpack.c.bf16 %v1018, %v1018
        %s1024 = scalar_lea.vmem %s2, 32
        %v1025 = vld [vmem:[%s1024] sm:$0xf]
        %v1026 = vld [vmem:[%s1024 + $0x4] sm:$0xf]
        %v1027 = vld [vmem:[%s1024 + $0x8] sm:$0xf]
        %v1028 = vld [vmem:[%s1024 + $0xc] sm:$0xf]
        %v1033 = vunpack.c.l.b16 %v1025
        %v1034 = vunpack.c.l.b16 %v1026
        %v1035 = vunpack.c.l.b16 %v1027
        %v1036 = vunpack.c.l.b16 %v1028
        %v1037 = vpack.c.b16 %v1034, %v1033
        %v1038 = vpack.c.b16 %v1036, %v1035
        %v1042 = vsel %vm482, %v1023, 0
        %1044 = vmatprep.subr.bf16.mxu0 0
        %1045 = vmatpush1.bf16.msra.mxu0 %v1037
        %1046 = vmatprep.subr.bf16.mxu0 0
        %1047 = vmatpush1.bf16.msra.mxu0 %v1038
        %1048 = vmatprep.subr.bf16.mxu0 0
        %1049 = vmatpush1.bf16.msra.mxu0 0
        %1050 = vmatprep.subr.bf16.mxu0 0
        %1051 = vmatpush1.bf16.msra.mxu0 0
        %1052 = vmatprep.subr.bf16.mxu0 0
        %1053 = vmatpush1.bf16.msra.mxu0 0
        %1054 = vmatprep.subr.bf16.mxu0 0
        %1055 = vmatpush1.bf16.msra.mxu0 0
        %1056 = vmatprep.subr.bf16.mxu0 0
        %1057 = vmatpush1.bf16.msra.mxu0 0
        %1058 = vmatprep.subr.bf16.mxu0 0
        %1059 = vmatpush1.bf16.msra.mxu0 0
        %1060 = vmatprep.subr.bf16.mxu0 0
        %1061 = vmatpush1.bf16.msra.mxu0 0
        %1062 = vmatprep.subr.bf16.mxu0 0
        %1063 = vmatpush1.bf16.msra.mxu0 0
        %1064 = vmatprep.subr.bf16.mxu0 0
        %1065 = vmatpush1.bf16.msra.mxu0 0
        %1066 = vmatprep.subr.bf16.mxu0 0
        %1067 = vmatpush1.bf16.msra.mxu0 0
        %1068 = vmatprep.subr.bf16.mxu0 0
        %1069 = vmatpush1.bf16.msra.mxu0 0
        %1070 = vmatprep.subr.bf16.mxu0 0
        %1071 = vmatpush1.bf16.msra.mxu0 0
        %1072 = vmatprep.subr.bf16.mxu0 0
        %1073 = vmatpush1.bf16.msra.mxu0 0
        %1074 = vmatprep.subr.bf16.mxu0 0
        %1075 = vmatpush1.bf16.msra.mxu0 0
        %1076 = vmatprep.mubr.bf16.mxu0 0
        %1077 = vmatmul.mubr.bf16.gmra.mrb[0].mxu0 %v1042
        %v1078 = vpop.f32.mrb[0].mxu0
        %v1079 = vadd.f32 0.0, %v1078
        %v1080 = vpop.f32.mrb[0].mxu0
        %v1081 = vpop.f32.mrb[0].mxu0
        %v1082 = vpop.f32.mrb[0].mxu0
        %1083 = vdwg.mxu0
        %v1084 = vadd.f32 %v907, %v1079
        %1085 = vrot.lane.b32.xlu0 %v567, 32
        %v1086 = vpop.permute.xlu0 %1085
        %1087 = vrot.lane.b32.xlu0 %v568, 32
        %v1088 = vpop.permute.xlu0 %1087
        %v1090 = vsel %vm482, %v1086, 0
        %v1093 = vsel %vm482, %v1088, 0
        %1095 = vmatprep.subr.bf16.mxu0 0
        %1096 = vmatpush1.bf16.xpose.msra.mxu0 %v1093
        %1097 = vmatprep.subr.bf16.mxu0 0
        %1098 = vmatpush1.bf16.xpose.msra.mxu0 0
        %1099 = vmatprep.subr.bf16.mxu0 0
        %1100 = vmatpush1.bf16.xpose.msra.mxu0 0
        %1101 = vmatprep.subr.bf16.mxu0 0
        %1102 = vmatpush1.bf16.xpose.msra.mxu0 0
        %1103 = vmatprep.subr.bf16.mxu0 0
        %1104 = vmatpush1.bf16.xpose.msra.mxu0 0
        %1105 = vmatprep.subr.bf16.mxu0 0
        %1106 = vmatpush1.bf16.xpose.msra.mxu0 0
        %1107 = vmatprep.subr.bf16.mxu0 0
        %1108 = vmatpush1.bf16.xpose.msra.mxu0 0
        %1109 = vmatprep.subr.bf16.mxu0 0
        %1110 = vmatpush1.bf16.xpose.msra.mxu0 0
        %1111 = vmatprep.subr.bf16.mxu0 0
        %1112 = vmatpush1.bf16.xpose.msra.mxu0 0
        %1113 = vmatprep.subr.bf16.mxu0 0
        %1114 = vmatpush1.bf16.xpose.msra.mxu0 0
        %1115 = vmatprep.subr.bf16.mxu0 0
        %1116 = vmatpush1.bf16.xpose.msra.mxu0 0
        %1117 = vmatprep.subr.bf16.mxu0 0
        %1118 = vmatpush1.bf16.xpose.msra.mxu0 0
        %1119 = vmatprep.subr.bf16.mxu0 0
        %1120 = vmatpush1.bf16.xpose.msra.mxu0 0
        %1121 = vmatprep.subr.bf16.mxu0 0
        %1122 = vmatpush1.bf16.xpose.msra.mxu0 0
        %1123 = vmatprep.subr.bf16.mxu0 0
        %1124 = vmatpush1.bf16.xpose.msra.mxu0 0
        %1125 = vmatprep.subr.bf16.mxu0 0
        %1126 = vmatpush1.bf16.xpose.msra.mxu0 0
        %1127 = vmatprep.mubr.bf16.mxu0 0
        %1128 = vmatmul.mubr.bf16.gmra.mrb[0].mxu0 %v1090
        %v1129 = vpop.f32.mrb[0].mxu0
        %v1130 = vadd.f32 0.0, %v1129
        %v1131 = vpop.f32.mrb[0].mxu0
        %v1132 = vpop.f32.mrb[0].mxu0
        %v1133 = vpop.f32.mrb[0].mxu0
        %1134 = vdwg.mxu0
        %v1135 = vmul.f32 %v1130, 0.17677669
        %v1136 = vsel %vm617, %v1135, -inf
        %1137 = vmax.xlane.f32.xlu0 %v1136
        %v1138 = vpop.xlane.xlu0 %1137
        %v1139 = vsub.f32 %v1135, %v1138
        %v1140 = vmul.f32 %v1139, 1.442695
        %v1141 = vpow.pop %v1140
        %v1142 = vsel %vm617, %v1141, 0.0
        %1143 = vadd.xlane.f32.xlu0 %v1142
        %v1144 = vpop.xlane.xlu0 %1143
        %v1145 = vrcp.pop %v1144
        %v1146 = vmul.f32 %v1141, %v1145
        %v1147 = vpack.c.bf16 %v1146, %v1146
        %1148 = vrot.lane.b32.xlu0 %v569, 32
        %v1149 = vpop.permute.xlu0 %1148
        %v1151 = vsel %vm617, %v1147, 0
        %v1154 = vsel %vm633, %v1149, 0
        %1156 = vmatprep.subr.bf16.mxu0 0
        %1157 = vmatpush1.bf16.msra.mxu0 %v1154
        %1158 = vmatprep.subr.bf16.mxu0 0
        %1159 = vmatpush1.bf16.msra.mxu0 0
        %1160 = vmatprep.subr.bf16.mxu0 0
        %1161 = vmatpush1.bf16.msra.mxu0 0
        %1162 = vmatprep.subr.bf16.mxu0 0
        %1163 = vmatpush1.bf16.msra.mxu0 0
        %1164 = vmatprep.subr.bf16.mxu0 0
        %1165 = vmatpush1.bf16.msra.mxu0 0
        %1166 = vmatprep.subr.bf16.mxu0 0
        %1167 = vmatpush1.bf16.msra.mxu0 0
        %1168 = vmatprep.subr.bf16.mxu0 0
        %1169 = vmatpush1.bf16.msra.mxu0 0
        %1170 = vmatprep.subr.bf16.mxu0 0
        %1171 = vmatpush1.bf16.msra.mxu0 0
        %1172 = vmatprep.subr.bf16.mxu0 0
        %1173 = vmatpush1.bf16.msra.mxu0 0
        %1174 = vmatprep.subr.bf16.mxu0 0
        %1175 = vmatpush1.bf16.msra.mxu0 0
        %1176 = vmatprep.subr.bf16.mxu0 0
        %1177 = vmatpush1.bf16.msra.mxu0 0
        %1178 = vmatprep.subr.bf16.mxu0 0
        %1179 = vmatpush1.bf16.msra.mxu0 0
        %1180 = vmatprep.subr.bf16.mxu0 0
        %1181 = vmatpush1.bf16.msra.mxu0 0
        %1182 = vmatprep.subr.bf16.mxu0 0
        %1183 = vmatpush1.bf16.msra.mxu0 0
        %1184 = vmatprep.subr.bf16.mxu0 0
        %1185 = vmatpush1.bf16.msra.mxu0 0
        %1186 = vmatprep.subr.bf16.mxu0 0
        %1187 = vmatpush1.bf16.msra.mxu0 0
        %1188 = vmatprep.mubr.bf16.mxu0 0
        %1189 = vmatmul.mubr.bf16.gmra.mrb[0].mxu0 %v1151
        %v1190 = vpop.f32.mrb[0].mxu0
        %v1191 = vadd.f32 0.0, %v1190
        %v1192 = vpop.f32.mrb[0].mxu0
        %v1193 = vpop.f32.mrb[0].mxu0
        %v1194 = vpop.f32.mrb[0].mxu0
        %1195 = vdwg.mxu0
        %v1196 = vpack.c.bf16 %v1191, %v1191
        %s1197 = scalar_lea.vmem %s2, 48
        %v1198 = vld [vmem:[%s1197] sm:$0xf]
        %v1199 = vld [vmem:[%s1197 + $0x4] sm:$0xf]
        %v1200 = vld [vmem:[%s1197 + $0x8] sm:$0xf]
        %v1201 = vld [vmem:[%s1197 + $0xc] sm:$0xf]
        %v1206 = vunpack.c.l.b16 %v1198
        %v1207 = vunpack.c.l.b16 %v1199
        %v1208 = vunpack.c.l.b16 %v1200
        %v1209 = vunpack.c.l.b16 %v1201
        %v1210 = vpack.c.b16 %v1207, %v1206
        %v1211 = vpack.c.b16 %v1209, %v1208
        %v1215 = vsel %vm482, %v1196, 0
        %1217 = vmatprep.subr.bf16.mxu0 0
        %1218 = vmatpush1.bf16.msra.mxu0 %v1210
        %1219 = vmatprep.subr.bf16.mxu0 0
        %1220 = vmatpush1.bf16.msra.mxu0 %v1211
        %1221 = vmatprep.subr.bf16.mxu0 0
        %1222 = vmatpush1.bf16.msra.mxu0 0
        %1223 = vmatprep.subr.bf16.mxu0 0
        %1224 = vmatpush1.bf16.msra.mxu0 0
        %1225 = vmatprep.subr.bf16.mxu0 0
        %1226 = vmatpush1.bf16.msra.mxu0 0
        %1227 = vmatprep.subr.bf16.mxu0 0
        %1228 = vmatpush1.bf16.msra.mxu0 0
        %1229 = vmatprep.subr.bf16.mxu0 0
        %1230 = vmatpush1.bf16.msra.mxu0 0
        %1231 = vmatprep.subr.bf16.mxu0 0
        %1232 = vmatpush1.bf16.msra.mxu0 0
        %1233 = vmatprep.subr.bf16.mxu0 0
        %1234 = vmatpush1.bf16.msra.mxu0 0
        %1235 = vmatprep.subr.bf16.mxu0 0
        %1236 = vmatpush1.bf16.msra.mxu0 0
        %1237 = vmatprep.subr.bf16.mxu0 0
        %1238 = vmatpush1.bf16.msra.mxu0 0
        %1239 = vmatprep.subr.bf16.mxu0 0
        %1240 = vmatpush1.bf16.msra.mxu0 0
        %1241 = vmatprep.subr.bf16.mxu0 0
        %1242 = vmatpush1.bf16.msra.mxu0 0
        %1243 = vmatprep.subr.bf16.mxu0 0
        %1244 = vmatpush1.bf16.msra.mxu0 0
        %1245 = vmatprep.subr.bf16.mxu0 0
        %1246 = vmatpush1.bf16.msra.mxu0 0
        %1247 = vmatprep.subr.bf16.mxu0 0
        %1248 = vmatpush1.bf16.msra.mxu0 0
        %1249 = vmatprep.mubr.bf16.mxu0 0
        %1250 = vmatmul.mubr.bf16.gmra.mrb[0].mxu0 %v1215
        %v1251 = vpop.f32.mrb[0].mxu0
        %v1252 = vadd.f32 0.0, %v1251
        %v1253 = vpop.f32.mrb[0].mxu0
        %v1254 = vpop.f32.mrb[0].mxu0
        %v1255 = vpop.f32.mrb[0].mxu0
        %1256 = vdwg.mxu0
        %v1257 = vadd.f32 %v1084, %v1252
        %v1258 = vld [vmem:[%s3] sm:$0x1]
        %v1260 = vlaneseq
        %v1261 = vshrl.u32 %v1260, 7
        %v1262 = vsub.s32 0, %v1261
        %v1263 = vrot.slane %v1258, %v1262
        %v1265 = vadd.f32 %v1257, %v1263
        %v1266 = vadd.f32 %v1265, %v440
        %v1267 = vld [vmem:[%s4] sm:$0x1]
        %v1268 = vld [vmem:[%s5] sm:$0x1]
        %v1269 = vsel %vm482, %v1266, 0.0
        %1270 = vadd.xlane.f32.xlu0 %v1269
        %v1271 = vpop.xlane.xlu0 %1270
        %v1272 = vrcp.pop 32.0
        %v1273 = vmul.f32 %v1271, %v1272
        %v1274 = vmul.f32 %v1266, %v1266
        %v1275 = vsel %vm482, %v1274, 0.0
        %1276 = vadd.xlane.f32.xlu0 %v1275
        %v1277 = vpop.xlane.xlu0 %1276
        %v1278 = vmul.f32 %v1277, %v1272
        %v1279 = vmul.f32 %v1273, %v1273
        %v1280 = vsub.f32 %v1278, %v1279
        %v1281 = vsub.f32 %v1266, %v1273
        %v1282 = vadd.f32 %v1280, 1e-05
        %v1283 = vrsqrt.pop %v1282
        %v1284 = vmul.f32 %v1281, %v1283
        %v1286 = vlaneseq
        %v1287 = vshrl.u32 %v1286, 7
        %v1288 = vsub.s32 0, %v1287
        %v1289 = vrot.slane %v1267, %v1288
        %v1291 = vmul.f32 %v1284, %v1289
        %v1293 = vlaneseq
        %v1294 = vshrl.u32 %v1293, 7
        %v1295 = vsub.s32 0, %v1294
        %v1296 = vrot.slane %v1268, %v1295
        %v1298 = vadd.f32 %v1291, %v1296
        %v1299 = vpack.c.bf16 %v1298, %v1298
        %v1300 = vld [vmem:[#allocation5] sm:$0xf]
        %v1301 = vld [vmem:[#allocation5 + $0x4] sm:$0xf]
        %v1302 = vld [vmem:[#allocation5 + $0x8] sm:$0xf]
        %v1303 = vld [vmem:[#allocation5 + $0xc] sm:$0xf]
        %v1304 = vld [vmem:[%s7] sm:$0x1]
        %v1306 = vlaneseq
        %v1307 = vshrl.u32 %v1306, 7
        %v1308 = vsub.s32 0, %v1307
        %v1309 = vrot.slane %v1304, %v1308
        %v1315 = vunpack.c.l.b16 %v1300
        %v1316 = vunpack.c.l.b16 %v1301
        %v1317 = vunpack.c.l.b16 %v1302
        %v1318 = vunpack.c.l.b16 %v1303
        %v1319 = vpack.c.b16 %v1316, %v1315
        %v1320 = vpack.c.b16 %v1318, %v1317
        %v1324 = vsel %vm482, %v1299, 0
        %1326 = vmatprep.subr.bf16.mxu0 0
        %1327 = vmatpush1.bf16.msra.mxu0 %v1319
        %1328 = vmatprep.subr.bf16.mxu0 0
        %1329 = vmatpush1.bf16.msra.mxu0 %v1320
        %1330 = vmatprep.subr.bf16.mxu0 0
        %1331 = vmatpush1.bf16.msra.mxu0 0
        %1332 = vmatprep.subr.bf16.mxu0 0
        %1333 = vmatpush1.bf16.msra.mxu0 0
        %1334 = vmatprep.subr.bf16.mxu0 0
        %1335 = vmatpush1.bf16.msra.mxu0 0
        %1336 = vmatprep.subr.bf16.mxu0 0
        %1337 = vmatpush1.bf16.msra.mxu0 0
        %1338 = vmatprep.subr.bf16.mxu0 0
        %1339 = vmatpush1.bf16.msra.mxu0 0
        %1340 = vmatprep.subr.bf16.mxu0 0
        %1341 = vmatpush1.bf16.msra.mxu0 0
        %1342 = vmatprep.subr.bf16.mxu0 0
        %1343 = vmatpush1.bf16.msra.mxu0 0
        %1344 = vmatprep.subr.bf16.mxu0 0
        %1345 = vmatpush1.bf16.msra.mxu0 0
        %1346 = vmatprep.subr.bf16.mxu0 0
        %1347 = vmatpush1.bf16.msra.mxu0 0
        %1348 = vmatprep.subr.bf16.mxu0 0
        %1349 = vmatpush1.bf16.msra.mxu0 0
        %1350 = vmatprep.subr.bf16.mxu0 0
        %1351 = vmatpush1.bf16.msra.mxu0 0
        %1352 = vmatprep.subr.bf16.mxu0 0
        %1353 = vmatpush1.bf16.msra.mxu0 0
        %1354 = vmatprep.subr.bf16.mxu0 0
        %1355 = vmatpush1.bf16.msra.mxu0 0
        %1356 = vmatprep.subr.bf16.mxu0 0
        %1357 = vmatpush1.bf16.msra.mxu0 0
        %1358 = vmatprep.mubr.bf16.mxu0 0
        %1359 = vmatmul.mubr.bf16.gmra.mrb[0].mxu0 %v1324
        %v1360 = vpop.f32.mrb[0].mxu0
        %v1361 = vadd.f32 %v1309, %v1360
        %v1362 = vpop.f32.mrb[0].mxu0
        %v1363 = vpop.f32.mrb[0].mxu0
        %v1364 = vpop.f32.mrb[0].mxu0
        %1365 = vdwg.mxu0
        %v1366 = vmax.f32 %v1361, 0.0
        %v1367 = vpack.c.bf16 %v1366, %v1366
        %v1368 = vld [vmem:[%s8] sm:$0xf]
        %v1369 = vld [vmem:[%s8 + $0x4] sm:$0xf]
        %v1370 = vld [vmem:[%s8 + $0x8] sm:$0xf]
        %v1371 = vld [vmem:[%s8 + $0xc] sm:$0xf]
        %v1372 = vld [vmem:[%s8 + $0x10] sm:$0xf]
        %v1373 = vld [vmem:[%s8 + $0x14] sm:$0xf]
        %v1374 = vld [vmem:[%s8 + $0x18] sm:$0xf]
        %v1375 = vld [vmem:[%s8 + $0x1c] sm:$0xf]
        %v1376 = vld [vmem:[%s8 + $0x20] sm:$0xf]
        %v1377 = vld [vmem:[%s8 + $0x24] sm:$0xf]
        %v1378 = vld [vmem:[%s8 + $0x28] sm:$0xf]
        %v1379 = vld [vmem:[%s8 + $0x2c] sm:$0xf]
        %v1380 = vld [vmem:[%s8 + $0x30] sm:$0xf]
        %v1381 = vld [vmem:[%s8 + $0x34] sm:$0xf]
        %v1382 = vld [vmem:[%s8 + $0x38] sm:$0xf]
        %v1383 = vld [vmem:[%s8 + $0x3c] sm:$0xf]
        %v1384 = vld [vmem:[%s9] sm:$0x1]
        %v1386 = vlaneseq
        %v1387 = vshrl.u32 %v1386, 7
        %v1388 = vsub.s32 0, %v1387
        %v1389 = vrot.slane %v1384, %v1388
        %v1407 = vunpack.c.l.b16 %v1368
        %v1408 = vunpack.c.l.b16 %v1369
        %v1409 = vunpack.c.l.b16 %v1370
        %v1410 = vunpack.c.l.b16 %v1371
        %v1411 = vunpack.c.l.b16 %v1372
        %v1412 = vunpack.c.l.b16 %v1373
        %v1413 = vunpack.c.l.b16 %v1374
        %v1414 = vunpack.c.l.b16 %v1375
        %v1415 = vunpack.c.l.b16 %v1376
        %v1416 = vunpack.c.l.b16 %v1377
        %v1417 = vunpack.c.l.b16 %v1378
        %v1418 = vunpack.c.l.b16 %v1379
        %v1419 = vunpack.c.l.b16 %v1380
        %v1420 = vunpack.c.l.b16 %v1381
        %v1421 = vunpack.c.l.b16 %v1382
        %v1422 = vunpack.c.l.b16 %v1383
        %v1423 = vpack.c.b16 %v1408, %v1407
        %v1424 = vpack.c.b16 %v1410, %v1409
        %v1425 = vpack.c.b16 %v1412, %v1411
        %v1426 = vpack.c.b16 %v1414, %v1413
        %v1427 = vpack.c.b16 %v1416, %v1415
        %v1428 = vpack.c.b16 %v1418, %v1417
        %v1429 = vpack.c.b16 %v1420, %v1419
        %v1430 = vpack.c.b16 %v1422, %v1421
        %1439 = vmatprep.subr.bf16.mxu0 0
        %1440 = vmatpush1.bf16.msra.mxu0 %v1423
        %1441 = vmatprep.subr.bf16.mxu0 0
        %1442 = vmatpush1.bf16.msra.mxu0 %v1424
        %1443 = vmatprep.subr.bf16.mxu0 0
        %1444 = vmatpush1.bf16.msra.mxu0 %v1425
        %1445 = vmatprep.subr.bf16.mxu0 0
        %1446 = vmatpush1.bf16.msra.mxu0 %v1426
        %1447 = vmatprep.subr.bf16.mxu0 0
        %1448 = vmatpush1.bf16.msra.mxu0 %v1427
        %1449 = vmatprep.subr.bf16.mxu0 0
        %1450 = vmatpush1.bf16.msra.mxu0 %v1428
        %1451 = vmatprep.subr.bf16.mxu0 0
        %1452 = vmatpush1.bf16.msra.mxu0 %v1429
        %1453 = vmatprep.subr.bf16.mxu0 0
        %1454 = vmatpush1.bf16.msra.mxu0 %v1430
        %1455 = vmatprep.subr.bf16.mxu0 0
        %1456 = vmatpush1.bf16.msra.mxu0 0
        %1457 = vmatprep.subr.bf16.mxu0 0
        %1458 = vmatpush1.bf16.msra.mxu0 0
        %1459 = vmatprep.subr.bf16.mxu0 0
        %1460 = vmatpush1.bf16.msra.mxu0 0
        %1461 = vmatprep.subr.bf16.mxu0 0
        %1462 = vmatpush1.bf16.msra.mxu0 0
        %1463 = vmatprep.subr.bf16.mxu0 0
        %1464 = vmatpush1.bf16.msra.mxu0 0
        %1465 = vmatprep.subr.bf16.mxu0 0
        %1466 = vmatpush1.bf16.msra.mxu0 0
        %1467 = vmatprep.subr.bf16.mxu0 0
        %1468 = vmatpush1.bf16.msra.mxu0 0
        %1469 = vmatprep.subr.bf16.mxu0 0
        %1470 = vmatpush1.bf16.msra.mxu0 0
        %1471 = vmatprep.mubr.bf16.mxu0 0
        %1472 = vmatmul.mubr.bf16.gmra.mrb[0].mxu0 %v1367
        %v1473 = vpop.f32.mrb[0].mxu0
        %v1474 = vadd.f32 %v1389, %v1473
        %v1475 = vpop.f32.mrb[0].mxu0
        %v1476 = vpop.f32.mrb[0].mxu0
        %v1477 = vpop.f32.mrb[0].mxu0
        %1478 = vdwg.mxu0
        %v1479 = vadd.f32 %v1474, %v1298
        %v1480 = vld [vmem:[%s10] sm:$0x1]
        %v1481 = vld [vmem:[%s11] sm:$0x1]
        %v1482 = vsel %vm482, %v1479, 0.0
        %1483 = vadd.xlane.f32.xlu0 %v1482
        %v1484 = vpop.xlane.xlu0 %1483
        %v1485 = vmul.f32 %v1484, %v1272
        %v1486 = vmul.f32 %v1479, %v1479
        %v1487 = vsel %vm482, %v1486, 0.0
        %1488 = vadd.xlane.f32.xlu0 %v1487
        %v1489 = vpop.xlane.xlu0 %1488
        %v1490 = vmul.f32 %v1489, %v1272
        %v1491 = vmul.f32 %v1485, %v1485
        %v1492 = vsub.f32 %v1490, %v1491
        %v1493 = vsub.f32 %v1479, %v1485
        %v1494 = vadd.f32 %v1492, 1e-05
        %v1495 = vrsqrt.pop %v1494
        %v1496 = vmul.f32 %v1493, %v1495
        %v1498 = vlaneseq
        %v1499 = vshrl.u32 %v1498, 7
        %v1500 = vsub.s32 0, %v1499
        %v1501 = vrot.slane %v1480, %v1500
        %v1503 = vmul.f32 %v1496, %v1501
        %v1505 = vlaneseq
        %v1506 = vshrl.u32 %v1505, 7
        %v1507 = vsub.s32 0, %v1506
        %v1508 = vrot.slane %v1481, %v1507
        %v1510 = vadd.f32 %v1503, %v1508
        %1511 = vst.msk [vmem:[%s434] sm:$0xff] %vm482, %v1510
        %s1512 = sand.u32 %s293, 1
        %s1513 = scalar_lea.sflag [#allocation4], %s1512
        %s1514 = sand.u32 %s293, 1
        %s1515 = smul.addr %s1514, 8
        %s1516 = scalar_lea.vmem [#allocation7], %s1515
        // Predicated region
        $region77: #{tpu_custom_call.1} parent=67 // pred_check
          %p1517 = pneg %p303
        $region78: #{tpu_custom_call.1} parent=67 // pred_check_branch
          %1519 = sbr.rel (%p1517) target = $region80
        $region79: #{tpu_custom_call.1} parent=67 // pred_region
          %s1521 = ssub.s32 128, 128
          %1522 = vsyncadd %s1513, %s1521
          %s1523 = smul.addr %s28, 128
          %s1524 = scalar_lea.hbm %s12, %s1523
          %s1526 = sshll.u32 %s1516, 4
          %s1527 = int_to_ptr.vmem [resolvable:$true] %s1526
          %1529 = dma.vmem_to_hbm [thread:$0]  %s1527, 128, %s1524, %s1513
        $region80: #{tpu_custom_call.1} parent=67 // pred_fallthru
          _
      $region68: #{tpu_custom_call.1} parent=5 // pred_fallthru
        _
      %p1530 = scmp.le.s32.totalorder 2, %s23
      // Predicated region
      $region81: #{tpu_custom_call.1} parent=5 // pred_check
        %p1531 = pneg %p1530
      $region82: #{tpu_custom_call.1} parent=5 // pred_check_branch
        %1533 = sbr.rel (%p1531) target = $region84
      $region83: #{tpu_custom_call.1} parent=5 // pred_region
        %s1534 = ssub.s32 %s23, 2
        // Predicated region
        $region85: #{tpu_custom_call.1} parent=83 // pred_check
          %p1535 = pneg %p309
        $region86: #{tpu_custom_call.1} parent=83 // pred_check_branch
          %1537 = sbr.rel (%p1535) target = $region88
        $region87: #{tpu_custom_call.1} parent=83 // pred_region
          %s1538 = sand.u32 %s294, 1
          %s1539 = scalar_lea.sflag [#allocation4], %s1538
          %s1540 = sand.u32 %s294, 1
          %s1541 = smul.addr %s1540, 8
          %s1542 = scalar_lea.vmem [#allocation7], %s1541
          %1543 = dma.done %s1539, 128
        $region88: #{tpu_custom_call.1} parent=83 // pred_fallthru
          _
      $region84: #{tpu_custom_call.1} parent=5 // pred_fallthru
        _
    $region6: #{tpu_custom_call.1} parent=1 // loop_footer
      %s27 = sadd.s32 1, %s23
    $region7: #{tpu_custom_call.1} parent=1 // loop_footer_branch
      %22 = sbr.rel target = $region3
    $region8: #{tpu_custom_call.1} parent=1 // loop_exit
      _
    %1544 = vsyncpa [#allocation3], 1
    %s1545 = scalar_lea.sflag [#allocation3], 1
    %1546 = vsyncpa %s1545, 1
    %1547 = vsyncpa [#allocation6], 1
    %1548 = vsyncpa [#allocation4], 1
    %s1549 = scalar_lea.sflag [#allocation4], 1
    %1550 = vsyncpa %s1549, 1

</llo_original>
